<compile_context>
chip_gen: v5e
topology: v5e:2x2
jax: 0.10.0
libtpu: 0.0.40
codegen_flags: <defaults>
</compile_context>

<pallas_src>
import jax
import jax.numpy as jnp
from jax import lax
from jax.experimental import pallas as pl
from jax.experimental.pallas import tpu as pltpu


# ----------------------------------------------------------------------------
# Generation-aware VMEM budgets
# ----------------------------------------------------------------------------
def _vmem_capacity_bytes():
    try:
        info = pltpu.get_tpu_info()
        for attr in ("vmem_capacity_bytes", "vmem_size_bytes", "vmem_bytes"):
            v = getattr(info, attr, None)
            if v:
                return int(v)
    except Exception:
        pass
    return 64 * 1024 * 1024                       # v7x-safe fallback


def _vmem_budgets():
    cap = _vmem_capacity_bytes()
    limit = min((cap * 3) // 4, 112 * 1024 * 1024)   # 96 MiB on v5e/v6e, 48 MiB on v7x
    return limit, limit // 2                          # (vmem_limit_bytes, tile budget)


def _pick_tile(n, per_unit_bytes, budget_bytes, max_tile=None):
    """Largest divisor of `n` that fits the VMEM budget (and <= max_tile)."""
    # TODO(synk): support ragged last tiles (pl.cdiv grid + masked halo/store)
    # so awkward / prime `n` does not collapse the tile to 1-2 rows.
    t = int(max(1, min(n, budget_bytes // max(per_unit_bytes, 1))))
    if max_tile is not None:
        t = min(t, max(1, int(max_tile)))
    while n % t:
        t -= 1
    return t


# ----------------------------------------------------------------------------
# conv 3x3 stride 2, pad (top 0, bottom 1, left 0, right 1)
# ----------------------------------------------------------------------------
def _conv3x3_stride2_pallas(x, w_hwio, bias, compute_dtype=None):
    """x: (B, H, W, C) NHWC with H, W even; returns (B, H//2, W//2, C)."""
    B, H, W, C = x.shape
    assert H % 2 == 0 and W % 2 == 0, "spatial dims must be even"
    Ho, Wo = H // 2, W // 2
    cd = compute_dtype if compute_dtype is not None else x.dtype

    # Free contiguous re-view of the raw input: no pad, no phase-split copies.
    # x[b, 2*i+p, 2*j+q, c] == xr[b, i, p, j, q, c].
    xr = x.reshape(B, Ho, 2, Wo, 2, C)
    if xr.dtype != cd:
        xr = xr.astype(cd)                        # bf16 on v6e/v7x halves HBM traffic
    w9 = w_hwio.reshape(9, C, C).astype(cd)       # taps flattened as kh*3 + kw
    b2 = bias.reshape(1, C).astype(jnp.float32)

    vmem_limit, tile_budget = _vmem_budgets()
    it = jnp.dtype(cd).itemsize
    # Rough resident bytes per output row: double-buffered input block +
    # in-kernel views (input dtype) + f32 accumulator / output block.
    per_row = Wo * C * (24 * it + 48)
    budget = max(tile_budget - 4 * 9 * C * C * it, per_row)
    max_tile = Ho if B > 1 else max(1, Ho // 2)   # keep >=2 grid steps (megacore)
    TH = _pick_tile(Ho, per_row, budget, max_tile)
    n_h = Ho // TH

    def kernel(x_ref, halo_ref, w_ref, b_ref, o_ref):
        # x_ref   : (TH, 2, Wo, 2, C)  rows 2*h*TH .. 2*h*TH+2*TH-1
        #           axes = (out-row, row-phase, out-col, col-phase, C)
        # halo_ref: (1, 1, Wo, 2, C)   first (even) input row of the NEXT tile
        # w_ref   : (9, C, C)          HWIO weights, (kh, kw) flattened
        # b_ref   : (1, C)
        # o_ref   : (TH, Wo, C)
        f32 = jnp.float32
        x = x_ref[...]                                     # (TH,2,Wo,2,C)
        halo = halo_ref[0, 0]                              # (Wo,2,C)
        # Bottom zero-pad row: the halo of the last row-tile is the pad row.
        is_last = pl.program_id(1) == pl.num_programs(1) - 1
        halo = jnp.where(is_last, jnp.zeros_like(halo), halo)

        # Row phases for taps kh = 0,1,2 of every output row in the tile.
        #   kh=0 -> input row 2t   ; kh=1 -> 2t+1 ; kh=2 -> 2t+2 (halo at t=TH-1)
        r_kh = [x[:, 0], x[:, 1]]                          # (TH,Wo,2,C) each
        if TH > 1:
            r_kh.append(jnp.concatenate([x[1:, 0], halo[None]], axis=0))
        else:
            r_kh.append(halo[None])

        acc = jnp.zeros((TH * Wo, C), f32)
        zero_col = jnp.zeros((TH, 1, C), x.dtype)
        for kh in range(3):                                # static unroll (3)
            r = r_kh[kh]
            e = r[:, :, 0, :]                              # kw=0 tap: col 2*wo
            o = r[:, :, 1, :]                              # kw=1 tap: col 2*wo+1
            # kw=2 tap: even columns shifted left by one output column; the
            # last output column reads the right zero-pad column.
            if Wo > 1:
                e2 = jnp.concatenate([e[:, 1:, :], zero_col], axis=1)
            else:
                e2 = jnp.zeros_like(e)
            acc += jnp.dot(e.reshape(TH * Wo, C), w_ref[3 * kh + 0],
                           preferred_element_type=f32)
            acc += jnp.dot(o.reshape(TH * Wo, C), w_ref[3 * kh + 1],
                           preferred_element_type=f32)
            acc += jnp.dot(e2.reshape(TH * Wo, C), w_ref[3 * kh + 2],
                           preferred_element_type=f32)
        acc += b_ref[...].astype(f32)
        o_ref[...] = acc.reshape(TH, Wo, C).astype(o_ref.dtype)   # one bulk store

    return pl.pallas_call(
        kernel,
        out_shape=jax.ShapeDtypeStruct((B, Ho, Wo, C), x.dtype),
        grid_spec=pltpu.PrefetchScalarGridSpec(
            num_scalar_prefetch=0,
            grid=(B, n_h),
            in_specs=[
                # main input tile (only HBM read of the activations)
                pl.BlockSpec((None, TH, 2, Wo, 2, C),
                             lambda b, h: (b, h, 0, 0, 0, 0)),
                # 1-row even-phase halo = first input row of the next tile;
                # clamped in-range for the last tile and zeroed in-kernel.
                pl.BlockSpec((None, 1, 1, Wo, 2, C),
                             lambda b, h: (b, jnp.minimum((h + 1) * TH, Ho - 1),
                                           0, 0, 0, 0)),
                pl.BlockSpec((9, C, C), lambda b, h: (0, 0, 0)),   # resident
                pl.BlockSpec((1, C), lambda b, h: (0, 0)),         # resident
            ],
            out_specs=pl.BlockSpec((None, TH, Wo, C),
                                   lambda b, h: (b, h, 0, 0)),
        ),
        compiler_params=pltpu.CompilerParams(
            dimension_semantics=("parallel", "parallel"),
            vmem_limit_bytes=vmem_limit),
    )(xr, xr, w9, b2)


# ----------------------------------------------------------------------------
# avg_pool2d(kernel=s, stride=s), floor semantics
# ----------------------------------------------------------------------------
def _avgpool_pallas(x, s):
    """x: (B, H, W, C) NHWC; returns (B, H//s, W//s, C)."""
    B, H, W, C = x.shape
    Ho, Wo = H // s, W // s
    if (H != Ho * s) or (W != Wo * s):           # floor semantics
        x = x[:, :Ho * s, :Wo * s, :]
    xr = x.reshape(B, Ho, s, Wo, s, C)           # free contiguous re-view

    vmem_limit, tile_budget = _vmem_budgets()
    it = x.dtype.itemsize
    per_row = Wo * C * (s * s * (2 * it + 4) + 16)
    max_tile = Ho if B > 1 else max(1, Ho // 2)
    TH = _pick_tile(Ho, per_row, tile_budget, max_tile)
    inv = 1.0 / float(s * s)

    def kernel(x_ref, o_ref):
        # x_ref: (TH, s, Wo, s, C); o_ref: (TH, Wo, C)
        xt = x_ref[...]
        acc = jnp.zeros((TH, Wo, C), jnp.float32)
        for dy in range(s):                      # static unroll, s is small
            for dx in range(s):
                acc = acc + xt[:, dy, :, dx, :].astype(jnp.float32)
        o_ref[...] = (acc * inv).astype(o_ref.dtype)      # one bulk store

    return pl.pallas_call(
        kernel,
        out_shape=jax.ShapeDtypeStruct((B, Ho, Wo, C), x.dtype),
        grid_spec=pltpu.PrefetchScalarGridSpec(
            num_scalar_prefetch=0,
            grid=(B, Ho // TH),
            in_specs=[pl.BlockSpec((None, TH, s, Wo, s, C),
                                   lambda b, h: (b, h, 0, 0, 0, 0))],
            out_specs=pl.BlockSpec((None, TH, Wo, C),
                                   lambda b, h: (b, h, 0, 0)),
        ),
        compiler_params=pltpu.CompilerParams(
            dimension_semantics=("parallel", "parallel"),
            vmem_limit_bytes=vmem_limit),
    )(xr)


# ----------------------------------------------------------------------------
# Module wrapper (NCHW in / NCHW out, matching the PyTorch interface)
# ----------------------------------------------------------------------------
class Downsample:
    """JAX/Pallas port of the PyTorch Downsample module.

    Perf notes:
      * keep the surrounding model NHWC end-to-end to drop the two boundary
        transposes (each is a full HBM round trip);
      * for real models pad C to a multiple of 128 so DMAs / MXU columns /
        output stores are lane-dense;
      * on v6e/v7x pass compute_dtype=jnp.bfloat16 (f32 accumulation is kept
        inside the kernel); on v5e bf16 operands still halve HBM reads.
    """

    def __init__(self, in_channels, with_conv, stride=2, key=None,
                 compute_dtype=None):
        self.with_conv = with_conv
        self.stride = stride
        self.compute_dtype = compute_dtype
        if key is None:
            key = jax.random.PRNGKey(0)
        if self.with_conv:
            k1, k2, k3, k4 = jax.random.split(key, 4)
            fan_in = in_channels * 3 * 3
            bound = 1.0 / (fan_in ** 0.5)
            # weights stored in HWIO (kh, kw, Cin, Cout), PyTorch default init
            self.w1 = jax.random.uniform(
                k1, (3, 3, in_channels, in_channels), jnp.float32, -bound, bound)
            self.b1 = jax.random.uniform(
                k2, (in_channels,), jnp.float32, -bound, bound)
            if stride == 4:
                self.w2 = jax.random.uniform(
                    k3, (3, 3, in_channels, in_channels), jnp.float32,
                    -bound, bound)
                self.b2 = jax.random.uniform(
                    k4, (in_channels,), jnp.float32, -bound, bound)

    def __call__(self, x_nchw):
        x = jnp.transpose(x_nchw, (0, 2, 3, 1))          # NCHW -> NHWC
        if self.with_conv:
            x = _conv3x3_stride2_pallas(x, self.w1, self.b1, self.compute_dtype)
            if self.stride == 4:
                x = _conv3x3_stride2_pallas(x, self.w2, self.b2,
                                            self.compute_dtype)
        else:
            x = _avgpool_pallas(x, self.stride)
        return jnp.transpose(x, (0, 3, 1, 2))            # NHWC -> NCHW


# ----------------------------------------------------------------------------
# Reference (plain JAX) for correctness checking
# ----------------------------------------------------------------------------
def _reference(module, x_nchw):
    x = jnp.transpose(x_nchw, (0, 2, 3, 1))
    if module.with_conv:
        hp = lax.Precision.HIGHEST               # near-exact f32 reference
        x = jnp.pad(x, ((0, 0), (0, 1), (0, 1), (0, 0)))
        x = lax.conv_general_dilated(
            x, module.w1, (2, 2), 'VALID',
            dimension_numbers=('NHWC', 'HWIO', 'NHWC'),
            precision=hp) + module.b1
        if module.stride == 4:
            x = jnp.pad(x, ((0, 0), (0, 1), (0, 1), (0, 0)))
            x = lax.conv_general_dilated(
                x, module.w2, (2, 2), 'VALID',
                dimension_numbers=('NHWC', 'HWIO', 'NHWC'),
                precision=hp) + module.b2
    else:
        s = module.stride
        x = lax.reduce_window(
            x, 0.0, lax.add, (1, s, s, 1), (1, s, s, 1), 'VALID') / (s * s)
    return jnp.transpose(x, (0, 3, 1, 2))


if __name__ == "__main__":
    key = jax.random.PRNGKey(0)
    kx, kp = jax.random.split(key)
    B, C, H, W = 2, 4, 16, 16
    x = jax.random.normal(kx, (B, C, H, W), jnp.float32)

    # Default matmul precision is used (the MXU truncates operands to bf16)
    # while the reference conv runs at HIGHEST -> 2e-2 tolerance.

    # with_conv=True, stride=2  (main path)
    ds2 = Downsample(C, with_conv=True, stride=2, key=kp)
    y2 = jax.block_until_ready(ds2(x))
    assert y2.shape == (B, C, H // 2, W // 2), y2.shape
    assert jnp.allclose(y2, _reference(ds2, x), atol=2e-2, rtol=2e-2)

    # with_conv=True, stride=4
    ds4 = Downsample(C, with_conv=True, stride=4, key=kp)
    y4 = jax.block_until_ready(ds4(x))
    assert y4.shape == (B, C, H // 4, W // 4), y4.shape
    assert jnp.allclose(y4, _reference(ds4, x), atol=2e-2, rtol=2e-2)

    # with_conv=False (avg pool path)
    dsp = Downsample(C, with_conv=False, stride=2, key=kp)
    yp = jax.block_until_ready(dsp(x))
    assert yp.shape == (B, C, H // 2, W // 2), yp.shape
    assert jnp.allclose(yp, _reference(dsp, x), atol=5e-3, rtol=5e-3)

    # bf16 operands (v6e/v7x production setting): halves HBM traffic; f32
    # accumulation is kept, so only operand rounding differs (loose check).
    dsb = Downsample(C, with_conv=True, stride=2, key=kp,
                     compute_dtype=jnp.bfloat16)
    yb = jax.block_until_ready(dsb(x))
    assert yb.shape == (B, C, H // 2, W // 2), yb.shape
    assert jnp.allclose(yb, _reference(dsb, x), atol=1e-1, rtol=1e-1)

    print("KERNEL_OK")
</pallas_src>

<mosaic_0001>
module attributes {stable_mosaic.version = 11 : i64} {
  func.func @kernel(%arg0: i32, %arg1: i32, %arg2: memref<1x8x2x8x2x4xf32, #tpu.memory_space<vmem>>, %arg3: memref<1x1x1x8x2x4xf32, #tpu.memory_space<vmem>>, %arg4: memref<9x4x4xf32, #tpu.memory_space<vmem>>, %arg5: memref<1x4xf32, #tpu.memory_space<vmem>>, %arg6: memref<1x8x8x4xf32, #tpu.memory_space<vmem>>) attributes {dimension_semantics = [#tpu.dimension_semantics<parallel>, #tpu.dimension_semantics<parallel>], iteration_bounds = array<i64: 2, 1>, scalar_prefetch = 0 : i64, scratch_operands = 0 : i64, tpu.core_type = #tpu.core_type<tc>, window_params = [{transform_indices = @transform_0, window_bounds = array<i64: 1, 8, 2, 8, 2, 4>}, {transform_indices = @transform_1, window_bounds = array<i64: 1, 1, 1, 8, 2, 4>}, {pipeline_mode = #tpu.pipeline_mode<synchronous>, transform_indices = @transform_2, window_bounds = array<i64: 9, 4, 4>}, {pipeline_mode = #tpu.pipeline_mode<synchronous>, transform_indices = @transform_3, window_bounds = array<i64: 1, 4>}, {transform_indices = @transform_4, window_bounds = array<i64: 1, 8, 8, 4>}]} {
    %c0 = arith.constant 0 : index
    %c0_0 = arith.constant 0 : index
    %c0_1 = arith.constant 0 : index
    %c0_2 = arith.constant 0 : index
    %c0_3 = arith.constant 0 : index
    %c0_4 = arith.constant 0 : index
    %0 = vector.load %arg2[%c0, %c0_0, %c0_1, %c0_2, %c0_3, %c0_4] : memref<1x8x2x8x2x4xf32, #tpu.memory_space<vmem>>, vector<1x8x2x8x2x4xf32>
    %1 = vector.shape_cast %0 : vector<1x8x2x8x2x4xf32> to vector<8x2x8x2x4xf32>
    %c0_5 = arith.constant 0 : index
    %c0_6 = arith.constant 0 : index
    %c0_7 = arith.constant 0 : index
    %c0_8 = arith.constant 0 : index
    %c0_9 = arith.constant 0 : index
    %c0_10 = arith.constant 0 : index
    %2 = vector.load %arg3[%c0_5, %c0_6, %c0_7, %c0_8, %c0_9, %c0_10] : memref<1x1x1x8x2x4xf32, #tpu.memory_space<vmem>>, vector<1x1x1x8x2x4xf32>
    %3 = vector.shape_cast %2 : vector<1x1x1x8x2x4xf32> to vector<8x2x4xf32>
    %c0_i32 = arith.constant 0 : i32
    %4 = arith.cmpi eq, %arg1, %c0_i32 : i32
    %cst = arith.constant 0.000000e+00 : f32
    %5 = vector.broadcast %cst : f32 to vector<8x2x4xf32>
    %6 = arith.select %4, %5, %3 : vector<8x2x4xf32>
    %7 = vector.extract_strided_slice %1 {offsets = [0, 0, 0, 0, 0], sizes = [8, 1, 8, 2, 4], strides = [1, 1, 1, 1, 1]} : vector<8x2x8x2x4xf32> to vector<8x1x8x2x4xf32>
    %8 = vector.shape_cast %7 : vector<8x1x8x2x4xf32> to vector<8x8x2x4xf32>
    %9 = vector.extract_strided_slice %1 {offsets = [0, 1, 0, 0, 0], sizes = [8, 1, 8, 2, 4], strides = [1, 1, 1, 1, 1]} : vector<8x2x8x2x4xf32> to vector<8x1x8x2x4xf32>
    %10 = vector.shape_cast %9 : vector<8x1x8x2x4xf32> to vector<8x8x2x4xf32>
    %11 = vector.extract_strided_slice %1 {offsets = [1, 0, 0, 0, 0], sizes = [7, 1, 8, 2, 4], strides = [1, 1, 1, 1, 1]} : vector<8x2x8x2x4xf32> to vector<7x1x8x2x4xf32>
    %12 = vector.shape_cast %11 : vector<7x1x8x2x4xf32> to vector<7x8x2x4xf32>
    %13 = vector.shape_cast %6 : vector<8x2x4xf32> to vector<1x8x2x4xf32>
    %14 = tpu.concatenate %12, %13 in 0 : vector<7x8x2x4xf32>, vector<1x8x2x4xf32> -> vector<8x8x2x4xf32>
    %cst_11 = arith.constant 0.000000e+00 : f32
    %15 = vector.broadcast %cst_11 : f32 to vector<64x4xf32>
    %cst_12 = arith.constant 0.000000e+00 : f32
    %16 = vector.broadcast %cst_12 : f32 to vector<8x1x4xf32>
    %17 = vector.extract_strided_slice %8 {offsets = [0, 0, 0, 0], sizes = [8, 8, 1, 4], strides = [1, 1, 1, 1]} : vector<8x8x2x4xf32> to vector<8x8x1x4xf32>
    %18 = vector.shape_cast %17 : vector<8x8x1x4xf32> to vector<8x8x4xf32>
    %19 = vector.extract_strided_slice %8 {offsets = [0, 0, 1, 0], sizes = [8, 8, 1, 4], strides = [1, 1, 1, 1]} : vector<8x8x2x4xf32> to vector<8x8x1x4xf32>
    %20 = vector.shape_cast %19 : vector<8x8x1x4xf32> to vector<8x8x4xf32>
    %21 = vector.extract_strided_slice %18 {offsets = [0, 1, 0], sizes = [8, 7, 4], strides = [1, 1, 1]} : vector<8x8x4xf32> to vector<8x7x4xf32>
    %22 = tpu.concatenate %21, %16 in 1 : vector<8x7x4xf32>, vector<8x1x4xf32> -> vector<8x8x4xf32>
    %23 = vector.shape_cast %18 : vector<8x8x4xf32> to vector<64x4xf32>
    %c0_13 = arith.constant 0 : index
    %c0_14 = arith.constant 0 : index
    %c0_15 = arith.constant 0 : index
    %24 = vector.load %arg4[%c0_13, %c0_14, %c0_15] : memref<9x4x4xf32, #tpu.memory_space<vmem>>, vector<1x4x4xf32>
    %25 = vector.shape_cast %24 : vector<1x4x4xf32> to vector<4x4xf32>
    %cst_16 = arith.constant dense<0.000000e+00> : vector<64x4xf32>
    %26 = tpu.matmul %23, %25, %cst_16 {dimension_numbers = #tpu.dot_dimension_numbers<[1], [0], [0], [1], [0, 0, 1, 1], [], []>} : vector<64x4xf32>, vector<4x4xf32>, vector<64x4xf32> -> vector<64x4xf32>
    %27 = arith.addf %15, %26 : vector<64x4xf32>
    %28 = vector.shape_cast %20 : vector<8x8x4xf32> to vector<64x4xf32>
    %c1 = arith.constant 1 : index
    %c0_17 = arith.constant 0 : index
    %c0_18 = arith.constant 0 : index
    %29 = vector.load %arg4[%c1, %c0_17, %c0_18] : memref<9x4x4xf32, #tpu.memory_space<vmem>>, vector<1x4x4xf32>
    %30 = vector.shape_cast %29 : vector<1x4x4xf32> to vector<4x4xf32>
    %cst_19 = arith.constant dense<0.000000e+00> : vector<64x4xf32>
    %31 = tpu.matmul %28, %30, %cst_19 {dimension_numbers = #tpu.dot_dimension_numbers<[1], [0], [0], [1], [0, 0, 1, 1], [], []>} : vector<64x4xf32>, vector<4x4xf32>, vector<64x4xf32> -> vector<64x4xf32>
    %32 = arith.addf %27, %31 : vector<64x4xf32>
    %33 = vector.shape_cast %22 : vector<8x8x4xf32> to vector<64x4xf32>
    %c2 = arith.constant 2 : index
    %c0_20 = arith.constant 0 : index
    %c0_21 = arith.constant 0 : index
    %34 = vector.load %arg4[%c2, %c0_20, %c0_21] : memref<9x4x4xf32, #tpu.memory_space<vmem>>, vector<1x4x4xf32>
    %35 = vector.shape_cast %34 : vector<1x4x4xf32> to vector<4x4xf32>
    %cst_22 = arith.constant dense<0.000000e+00> : vector<64x4xf32>
    %36 = tpu.matmul %33, %35, %cst_22 {dimension_numbers = #tpu.dot_dimension_numbers<[1], [0], [0], [1], [0, 0, 1, 1], [], []>} : vector<64x4xf32>, vector<4x4xf32>, vector<64x4xf32> -> vector<64x4xf32>
    %37 = arith.addf %32, %36 : vector<64x4xf32>
    %38 = vector.extract_strided_slice %10 {offsets = [0, 0, 0, 0], sizes = [8, 8, 1, 4], strides = [1, 1, 1, 1]} : vector<8x8x2x4xf32> to vector<8x8x1x4xf32>
    %39 = vector.shape_cast %38 : vector<8x8x1x4xf32> to vector<8x8x4xf32>
    %40 = vector.extract_strided_slice %10 {offsets = [0, 0, 1, 0], sizes = [8, 8, 1, 4], strides = [1, 1, 1, 1]} : vector<8x8x2x4xf32> to vector<8x8x1x4xf32>
    %41 = vector.shape_cast %40 : vector<8x8x1x4xf32> to vector<8x8x4xf32>
    %42 = vector.extract_strided_slice %39 {offsets = [0, 1, 0], sizes = [8, 7, 4], strides = [1, 1, 1]} : vector<8x8x4xf32> to vector<8x7x4xf32>
    %43 = tpu.concatenate %42, %16 in 1 : vector<8x7x4xf32>, vector<8x1x4xf32> -> vector<8x8x4xf32>
    %44 = vector.shape_cast %39 : vector<8x8x4xf32> to vector<64x4xf32>
    %c3 = arith.constant 3 : index
    %c0_23 = arith.constant 0 : index
    %c0_24 = arith.constant 0 : index
    %45 = vector.load %arg4[%c3, %c0_23, %c0_24] : memref<9x4x4xf32, #tpu.memory_space<vmem>>, vector<1x4x4xf32>
    %46 = vector.shape_cast %45 : vector<1x4x4xf32> to vector<4x4xf32>
    %cst_25 = arith.constant dense<0.000000e+00> : vector<64x4xf32>
    %47 = tpu.matmul %44, %46, %cst_25 {dimension_numbers = #tpu.dot_dimension_numbers<[1], [0], [0], [1], [0, 0, 1, 1], [], []>} : vector<64x4xf32>, vector<4x4xf32>, vector<64x4xf32> -> vector<64x4xf32>
    %48 = arith.addf %37, %47 : vector<64x4xf32>
    %49 = vector.shape_cast %41 : vector<8x8x4xf32> to vector<64x4xf32>
    %c4 = arith.constant 4 : index
    %c0_26 = arith.constant 0 : index
    %c0_27 = arith.constant 0 : index
    %50 = vector.load %arg4[%c4, %c0_26, %c0_27] : memref<9x4x4xf32, #tpu.memory_space<vmem>>, vector<1x4x4xf32>
    %51 = vector.shape_cast %50 : vector<1x4x4xf32> to vector<4x4xf32>
    %cst_28 = arith.constant dense<0.000000e+00> : vector<64x4xf32>
    %52 = tpu.matmul %49, %51, %cst_28 {dimension_numbers = #tpu.dot_dimension_numbers<[1], [0], [0], [1], [0, 0, 1, 1], [], []>} : vector<64x4xf32>, vector<4x4xf32>, vector<64x4xf32> -> vector<64x4xf32>
    %53 = arith.addf %48, %52 : vector<64x4xf32>
    %54 = vector.shape_cast %43 : vector<8x8x4xf32> to vector<64x4xf32>
    %c5 = arith.constant 5 : index
    %c0_29 = arith.constant 0 : index
    %c0_30 = arith.constant 0 : index
    %55 = vector.load %arg4[%c5, %c0_29, %c0_30] : memref<9x4x4xf32, #tpu.memory_space<vmem>>, vector<1x4x4xf32>
    %56 = vector.shape_cast %55 : vector<1x4x4xf32> to vector<4x4xf32>
    %cst_31 = arith.constant dense<0.000000e+00> : vector<64x4xf32>
    %57 = tpu.matmul %54, %56, %cst_31 {dimension_numbers = #tpu.dot_dimension_numbers<[1], [0], [0], [1], [0, 0, 1, 1], [], []>} : vector<64x4xf32>, vector<4x4xf32>, vector<64x4xf32> -> vector<64x4xf32>
    %58 = arith.addf %53, %57 : vector<64x4xf32>
    %59 = vector.extract_strided_slice %14 {offsets = [0, 0, 0, 0], sizes = [8, 8, 1, 4], strides = [1, 1, 1, 1]} : vector<8x8x2x4xf32> to vector<8x8x1x4xf32>
    %60 = vector.shape_cast %59 : vector<8x8x1x4xf32> to vector<8x8x4xf32>
    %61 = vector.extract_strided_slice %14 {offsets = [0, 0, 1, 0], sizes = [8, 8, 1, 4], strides = [1, 1, 1, 1]} : vector<8x8x2x4xf32> to vector<8x8x1x4xf32>
    %62 = vector.shape_cast %61 : vector<8x8x1x4xf32> to vector<8x8x4xf32>
    %63 = vector.extract_strided_slice %60 {offsets = [0, 1, 0], sizes = [8, 7, 4], strides = [1, 1, 1]} : vector<8x8x4xf32> to vector<8x7x4xf32>
    %64 = tpu.concatenate %63, %16 in 1 : vector<8x7x4xf32>, vector<8x1x4xf32> -> vector<8x8x4xf32>
    %65 = vector.shape_cast %60 : vector<8x8x4xf32> to vector<64x4xf32>
    %c6 = arith.constant 6 : index
    %c0_32 = arith.constant 0 : index
    %c0_33 = arith.constant 0 : index
    %66 = vector.load %arg4[%c6, %c0_32, %c0_33] : memref<9x4x4xf32, #tpu.memory_space<vmem>>, vector<1x4x4xf32>
    %67 = vector.shape_cast %66 : vector<1x4x4xf32> to vector<4x4xf32>
    %cst_34 = arith.constant dense<0.000000e+00> : vector<64x4xf32>
    %68 = tpu.matmul %65, %67, %cst_34 {dimension_numbers = #tpu.dot_dimension_numbers<[1], [0], [0], [1], [0, 0, 1, 1], [], []>} : vector<64x4xf32>, vector<4x4xf32>, vector<64x4xf32> -> vector<64x4xf32>
    %69 = arith.addf %58, %68 : vector<64x4xf32>
    %70 = vector.shape_cast %62 : vector<8x8x4xf32> to vector<64x4xf32>
    %c7 = arith.constant 7 : index
    %c0_35 = arith.constant 0 : index
    %c0_36 = arith.constant 0 : index
    %71 = vector.load %arg4[%c7, %c0_35, %c0_36] : memref<9x4x4xf32, #tpu.memory_space<vmem>>, vector<1x4x4xf32>
    %72 = vector.shape_cast %71 : vector<1x4x4xf32> to vector<4x4xf32>
    %cst_37 = arith.constant dense<0.000000e+00> : vector<64x4xf32>
    %73 = tpu.matmul %70, %72, %cst_37 {dimension_numbers = #tpu.dot_dimension_numbers<[1], [0], [0], [1], [0, 0, 1, 1], [], []>} : vector<64x4xf32>, vector<4x4xf32>, vector<64x4xf32> -> vector<64x4xf32>
    %74 = arith.addf %69, %73 : vector<64x4xf32>
    %75 = vector.shape_cast %64 : vector<8x8x4xf32> to vector<64x4xf32>
    %c8 = arith.constant 8 : index
    %c0_38 = arith.constant 0 : index
    %c0_39 = arith.constant 0 : index
    %76 = vector.load %arg4[%c8, %c0_38, %c0_39] : memref<9x4x4xf32, #tpu.memory_space<vmem>>, vector<1x4x4xf32>
    %77 = vector.shape_cast %76 : vector<1x4x4xf32> to vector<4x4xf32>
    %cst_40 = arith.constant dense<0.000000e+00> : vector<64x4xf32>
    %78 = tpu.matmul %75, %77, %cst_40 {dimension_numbers = #tpu.dot_dimension_numbers<[1], [0], [0], [1], [0, 0, 1, 1], [], []>} : vector<64x4xf32>, vector<4x4xf32>, vector<64x4xf32> -> vector<64x4xf32>
    %79 = arith.addf %74, %78 : vector<64x4xf32>
    %c0_41 = arith.constant 0 : index
    %c0_42 = arith.constant 0 : index
    %80 = vector.load %arg5[%c0_41, %c0_42] : memref<1x4xf32, #tpu.memory_space<vmem>>, vector<1x4xf32>
    %81 = vector.broadcast %80 : vector<1x4xf32> to vector<64x4xf32>
    %82 = arith.addf %79, %81 : vector<64x4xf32>
    %83 = vector.shape_cast %82 : vector<64x4xf32> to vector<8x8x4xf32>
    %c0_43 = arith.constant 0 : index
    %c0_44 = arith.constant 0 : index
    %c0_45 = arith.constant 0 : index
    %c0_46 = arith.constant 0 : index
    %84 = vector.load %arg6[%c0_43, %c0_44, %c0_45, %c0_46] : memref<1x8x8x4xf32, #tpu.memory_space<vmem>>, vector<1x8x8x4xf32>
    %85 = vector.shape_cast %84 : vector<1x8x8x4xf32> to vector<8x8x4xf32>
    %86 = vector.shape_cast %83 : vector<8x8x4xf32> to vector<1x8x8x4xf32>
    tpu.vector_store %arg6[%c0_43, %c0_44, %c0_45, %c0_46], %86 {strides = array<i32>} : memref<1x8x8x4xf32, #tpu.memory_space<vmem>>, vector<1x8x8x4xf32>,
    return
  }
  func.func @transform_0(%arg0: i32, %arg1: i32) -> (i32, i32, i32, i32, i32, i32) {
    %c0_i32 = arith.constant 0 : i32
    %c0_i32_0 = arith.constant 0 : i32
    %c0_i32_1 = arith.constant 0 : i32
    %c0_i32_2 = arith.constant 0 : i32
    %c0_i32_3 = arith.constant 0 : i32
    return %arg0, %arg1, %c0_i32, %c0_i32_0, %c0_i32_1, %c0_i32_2 : i32, i32, i32, i32, i32, i32
  }
  func.func @transform_1(%arg0: i32, %arg1: i32) -> (i32, i32, i32, i32, i32, i32) {
    %c1_i32 = arith.constant 1 : i32
    %0 = arith.addi %arg1, %c1_i32 : i32
    %c8_i32 = arith.constant 8 : i32
    %1 = arith.muli %0, %c8_i32 : i32
    %c7_i32 = arith.constant 7 : i32
    %2 = arith.minsi %1, %c7_i32 : i32
    %c0_i32 = arith.constant 0 : i32
    %c0_i32_0 = arith.constant 0 : i32
    %c0_i32_1 = arith.constant 0 : i32
    %c0_i32_2 = arith.constant 0 : i32
    %c0_i32_3 = arith.constant 0 : i32
    return %arg0, %2, %c0_i32, %c0_i32_0, %c0_i32_1, %c0_i32_2 : i32, i32, i32, i32, i32, i32
  }
  func.func @transform_2(%arg0: i32, %arg1: i32) -> (i32, i32, i32) {
    %c0_i32 = arith.constant 0 : i32
    %c0_i32_0 = arith.constant 0 : i32
    %c0_i32_1 = arith.constant 0 : i32
    %c0_i32_2 = arith.constant 0 : i32
    return %c0_i32, %c0_i32_0, %c0_i32_1 : i32, i32, i32
  }
  func.func @transform_3(%arg0: i32, %arg1: i32) -> (i32, i32) {
    %c0_i32 = arith.constant 0 : i32
    %c0_i32_0 = arith.constant 0 : i32
    %c0_i32_1 = arith.constant 0 : i32
    return %c0_i32, %c0_i32_0 : i32, i32
  }
  func.func @transform_4(%arg0: i32, %arg1: i32) -> (i32, i32, i32, i32) {
    %c0_i32 = arith.constant 0 : i32
    %c0_i32_0 = arith.constant 0 : i32
    %c0_i32_1 = arith.constant 0 : i32
    return %arg0, %arg1, %c0_i32, %c0_i32_0 : i32, i32, i32, i32
  }
}

</mosaic_0001>

<llo_original>
// kernel: tpu_custom_call.1
$region0: #{tpu_custom_call.1}
  #allocation0 [shape = 'u32[]', space=smem, size = 0x4, offset = 0x4, fixed_abs, tag = 'smem constant byte address 0x4 - core index']
  #allocation1 [shape = 'u32[72,128]{1,0:T(1,128)}', space=vmem, size = 0x9000, scoped, tag = 'internal scratch']
  %s0 = inlined_call_operand.vmem [shape: f32[2,8,2,8,2,4], index: 0, kind: input, shape index: {}]
  %s1 = inlined_call_operand.vmem [shape: f32[2,8,2,8,2,4], index: 1, kind: input, shape index: {}]
  %s2 = inlined_call_operand.vmem [shape: f32[9,4,4], index: 2, kind: input, shape index: {}]
  %s3 = inlined_call_operand.vmem [shape: f32[1,4], index: 3, kind: input, shape index: {}]
  %s4 = inlined_call_operand.vmem [shape: f32[2,8,8,4], index: 4, kind: output, shape index: {}]
  %s5 = sld [smem:[#allocation0]]
  $region49: #{tpu_custom_call.1} parent=0
    _
  %s7 = ssub.s32 1, %s5
  %s8 = scalar_select 0, %s7, %s5
  loop: start=0, step=1, limit=4
  $region2: #{tpu_custom_call.1} parent=0 // loop_pre_header
    _
  $region3: #{tpu_custom_call.1} parent=0 // loop_header
    %s10 = sphi 0, %s14
    %p11 = scmp.ge.s32.totalorder %s10, 4
    %s17 = sphi 0, %s29
    %s18 = sphi 0, %s25
    %s19 = sphi 0, %s17
    %s20 = sphi 0, %s18
    %s21 = sphi 0, %s19
    %s22 = sphi 0, %s20
    %s34 = sphi 0, %s36
    %s37 = sphi 0, %s34
    %s38 = sphi 0, %s37
    %s54 = sphi 0, %s38
    %s70 = sphi 0, %s72
    %s73 = sphi 0, %s70
    %s74 = sphi 0, %s73
    %s90 = sphi 0, %s74
    %s94 = sphi 0, %s94
    %s96 = sphi 0, %s94
    %s97 = sphi 0, %s96
    %s111 = sphi 0, %s97
    %s115 = sphi 0, %s115
    %s117 = sphi 0, %s115
    %s118 = sphi 0, %s117
    %s132 = sphi 0, %s118
    %s140 = sphi 0, %s142
    %s143 = sphi 0, %s140
    %s144 = sphi 0, %s143
    %s160 = sphi 0, %s144
  $region4: #{tpu_custom_call.1} parent=0 // loop_header_branch
    %13 = sbr.rel (%p11) target = $region8
  $region5: #{tpu_custom_call.1} parent=0 // loop_body
    %s15 = ssub.s32 %s10, 1
    %s16 = ssub.s32 %s10, 2
    %s23 = sadd.s32 1, %s18
    %p24 = scmp.ge.s32.totalorder %s23, 1
    %s25 = scalar_select %p24, 0, %s23
    %s26 = sadd.s32 1, %s17
    %s27 = scalar_select %p24, %s26, %s17
    %p28 = scmp.ge.s32.totalorder %s27, 2
    %s29 = scalar_select %p28, 0, %s27
    %s30 = ssub.s32 %s17, %s29
    %s31 = ssub.s32 %s18, %s25
    %s32 = sor.u32 %s30, %s31
    %p33 = scmp.eq.s32.totalorder %s32, 0
    %s35 = sadd.s32 %s34, 1
    %s36 = scalar_select %p33, %s34, %s35
    %p39 = pneg %p33
    %p40 = scmp.eq.s32.totalorder %s10, 1
    %p41 = por %p39, %p40
    %p42 = scmp.ne.s32.totalorder %s34, %s37
    %p43 = scmp.eq.s32.totalorder %s10, 0
    %p44 = por %p42, %p43
    %p45 = scmp.ne.s32.totalorder %s34, %s37
    %p46 = scmp.eq.s32.totalorder %s15, 1
    %p47 = por %p45, %p46
    %p48 = scmp.ne.s32.totalorder %s37, %s38
    %p49 = scmp.eq.s32.totalorder %s15, 0
    %p50 = por %p48, %p49
    %p51 = scmp.ne.s32.totalorder %s37, %s38
    %p52 = scmp.eq.s32.totalorder %s16, 1
    %p53 = por %p51, %p52
    %p55 = scmp.ne.s32.totalorder %s38, %s54
    %p56 = scmp.eq.s32.totalorder %s16, 0
    %p57 = por %p55, %p56
    %s58 = sadd.s32 %s18, 1
    %s59 = smul.u32 %s58, 8
    %p60 = scmp.lt.s32.totalorder %s59, 7
    %s61 = scalar_select %p60, %s59, 7
    %s62 = sadd.s32 %s25, 1
    %s63 = smul.u32 %s62, 8
    %p64 = scmp.lt.s32.totalorder %s63, 7
    %s65 = scalar_select %p64, %s63, 7
    %s66 = ssub.s32 %s17, %s29
    %s67 = ssub.s32 %s61, %s65
    %s68 = sor.u32 %s66, %s67
    %p69 = scmp.eq.s32.totalorder %s68, 0
    %s71 = sadd.s32 %s70, 1
    %s72 = scalar_select %p69, %s70, %s71
    %p75 = pneg %p69
    %p76 = scmp.eq.s32.totalorder %s10, 1
    %p77 = por %p75, %p76
    %p78 = scmp.ne.s32.totalorder %s70, %s73
    %p79 = scmp.eq.s32.totalorder %s10, 0
    %p80 = por %p78, %p79
    %p81 = scmp.ne.s32.totalorder %s70, %s73
    %p82 = scmp.eq.s32.totalorder %s15, 1
    %p83 = por %p81, %p82
    %p84 = scmp.ne.s32.totalorder %s73, %s74
    %p85 = scmp.eq.s32.totalorder %s15, 0
    %p86 = por %p84, %p85
    %p87 = scmp.ne.s32.totalorder %s73, %s74
    %p88 = scmp.eq.s32.totalorder %s16, 1
    %p89 = por %p87, %p88
    %p91 = scmp.ne.s32.totalorder %s74, %s90
    %p92 = scmp.eq.s32.totalorder %s16, 0
    %p93 = por %p91, %p92
    %s95 = sadd.s32 %s94, 1
    %p98 = scmp.eq.s32.totalorder %s10, 1
    %p99 = scmp.ne.s32.totalorder %s94, %s96
    %p100 = scmp.eq.s32.totalorder %s10, 0
    %p101 = por %p99, %p100
    %p102 = scmp.ne.s32.totalorder %s94, %s96
    %p103 = scmp.eq.s32.totalorder %s15, 1
    %p104 = por %p102, %p103
    %p105 = scmp.ne.s32.totalorder %s96, %s97
    %p106 = scmp.eq.s32.totalorder %s15, 0
    %p107 = por %p105, %p106
    %p108 = scmp.ne.s32.totalorder %s96, %s97
    %p109 = scmp.eq.s32.totalorder %s16, 1
    %p110 = por %p108, %p109
    %p112 = scmp.ne.s32.totalorder %s97, %s111
    %p113 = scmp.eq.s32.totalorder %s16, 0
    %p114 = por %p112, %p113
    %s116 = sadd.s32 %s115, 1
    %p119 = scmp.eq.s32.totalorder %s10, 1
    %p120 = scmp.ne.s32.totalorder %s115, %s117
    %p121 = scmp.eq.s32.totalorder %s10, 0
    %p122 = por %p120, %p121
    %p123 = scmp.ne.s32.totalorder %s115, %s117
    %p124 = scmp.eq.s32.totalorder %s15, 1
    %p125 = por %p123, %p124
    %p126 = scmp.ne.s32.totalorder %s117, %s118
    %p127 = scmp.eq.s32.totalorder %s15, 0
    %p128 = por %p126, %p127
    %p129 = scmp.ne.s32.totalorder %s117, %s118
    %p130 = scmp.eq.s32.totalorder %s16, 1
    %p131 = por %p129, %p130
    %p133 = scmp.ne.s32.totalorder %s118, %s132
    %p134 = scmp.eq.s32.totalorder %s16, 0
    %p135 = por %p133, %p134
    %s136 = ssub.s32 %s17, %s29
    %s137 = ssub.s32 %s18, %s25
    %s138 = sor.u32 %s136, %s137
    %p139 = scmp.eq.s32.totalorder %s138, 0
    %s141 = sadd.s32 %s140, 1
    %s142 = scalar_select %p139, %s140, %s141
    %p145 = pneg %p139
    %p146 = scmp.eq.s32.totalorder %s10, 1
    %p147 = por %p145, %p146
    %p148 = scmp.ne.s32.totalorder %s140, %s143
    %p149 = scmp.eq.s32.totalorder %s10, 0
    %p150 = por %p148, %p149
    %p151 = scmp.ne.s32.totalorder %s140, %s143
    %p152 = scmp.eq.s32.totalorder %s15, 1
    %p153 = por %p151, %p152
    %p154 = scmp.ne.s32.totalorder %s143, %s144
    %p155 = scmp.eq.s32.totalorder %s15, 0
    %p156 = por %p154, %p155
    %p157 = scmp.ne.s32.totalorder %s143, %s144
    %p158 = scmp.eq.s32.totalorder %s16, 1
    %p159 = por %p157, %p158
    %p161 = scmp.ne.s32.totalorder %s144, %s160
    %p162 = scmp.eq.s32.totalorder %s16, 0
    %p163 = por %p161, %p162
    %p164 = scmp.le.s32.totalorder 1, %s10
    %p165 = scmp.lt.s32.totalorder %s10, 3
    %p166 = pnand %p164, %p165
    %p167 = pneg %p166
    // Predicated region
    $region9: #{tpu_custom_call.1} parent=5 // pred_check
      _
    $region10: #{tpu_custom_call.1} parent=5 // pred_check_branch
      %169 = sbr.rel (%p166) target = $region12
    $region11: #{tpu_custom_call.1} parent=5 // pred_region
      %s170 = ssub.s32 %s10, 1
      // Predicated region
      $region13: #{tpu_custom_call.1} parent=11 // pred_check
        %p171 = pneg %p107
      $region14: #{tpu_custom_call.1} parent=11 // pred_check_branch
        %173 = sbr.rel (%p171) target = $region16
      $region15: #{tpu_custom_call.1} parent=11 // pred_region
        _
      $region16: #{tpu_custom_call.1} parent=11 // pred_fallthru
        _
      // Predicated region
      $region17: #{tpu_custom_call.1} parent=11 // pred_check
        %p174 = pneg %p128
      $region18: #{tpu_custom_call.1} parent=11 // pred_check_branch
        %176 = sbr.rel (%p174) target = $region20
      $region19: #{tpu_custom_call.1} parent=11 // pred_region
        _
      $region20: #{tpu_custom_call.1} parent=11 // pred_fallthru
        _
    $region12: #{tpu_custom_call.1} parent=5 // pred_fallthru
      _
    %p177 = scmp.lt.s32.totalorder %s10, 2
    // Predicated region
    $region21: #{tpu_custom_call.1} parent=5 // pred_check
      %p178 = pneg %p177
    $region22: #{tpu_custom_call.1} parent=5 // pred_check_branch
      %180 = sbr.rel (%p178) target = $region24
    $region23: #{tpu_custom_call.1} parent=5 // pred_region
      // Predicated region
      $region25: #{tpu_custom_call.1} parent=23 // pred_check
        %p181 = pneg %p44
      $region26: #{tpu_custom_call.1} parent=23 // pred_check_branch
        %183 = sbr.rel (%p181) target = $region28
      $region27: #{tpu_custom_call.1} parent=23 // pred_region
        %s184 = smul.u32 8, %s18
        %p185 = scmp.lt.s32.totalorder %s17, 1
        %s186 = scalar_select %p185, %s17, 1
        %p187 = scmp.lt.s32.totalorder %s184, 7
        %s188 = scalar_select %p187, %s184, 7
        %s189 = smul.addr %s188, 16
        %s190 = smul.addr %s186, 128
        %s191 = sadd.s32 %s189, %s190
        %s192 = smul.addr %s191, 2
        %s193 = scalar_lea.vmem %s0, %s192
        %s194 = smul.u32 8, %s18
      $region28: #{tpu_custom_call.1} parent=23 // pred_fallthru
        _
      // Predicated region
      $region29: #{tpu_custom_call.1} parent=23 // pred_check
        %p195 = pneg %p80
      $region30: #{tpu_custom_call.1} parent=23 // pred_check_branch
        %197 = sbr.rel (%p195) target = $region32
      $region31: #{tpu_custom_call.1} parent=23 // pred_region
        %s198 = sadd.s32 %s18, 1
        %s199 = smul.u32 %s198, 8
        %p200 = scmp.lt.s32.totalorder %s199, 7
        %s201 = scalar_select %p200, %s199, 7
        %p202 = scmp.lt.s32.totalorder %s17, 1
        %s203 = scalar_select %p202, %s17, 1
        %p204 = scmp.lt.s32.totalorder %s201, 7
        %s205 = scalar_select %p204, %s201, 7
        %s206 = smul.addr %s205, 16
        %s207 = smul.addr %s203, 128
        %s208 = sadd.s32 %s206, %s207
        %s209 = smul.addr %s208, 2
        %s210 = scalar_lea.vmem %s1, %s209
        %s211 = sadd.s32 %s18, 1
        %s212 = smul.u32 %s211, 8
        %p213 = scmp.lt.s32.totalorder %s212, 7
        %s214 = scalar_select %p213, %s212, 7
      $region32: #{tpu_custom_call.1} parent=23 // pred_fallthru
        _
    $region24: #{tpu_custom_call.1} parent=5 // pred_fallthru
      _
    %p215 = scmp.le.s32.totalorder 1, %s10
    %p216 = scmp.lt.s32.totalorder %s10, 3
    %p217 = pnand %p215, %p216
    %p218 = pneg %p217
    // Predicated region
    $region33: #{tpu_custom_call.1} parent=5 // pred_check
      _
    $region34: #{tpu_custom_call.1} parent=5 // pred_check_branch
      %220 = sbr.rel (%p217) target = $region36
    $region35: #{tpu_custom_call.1} parent=5 // pred_region
      %s221 = ssub.s32 %s10, 1
      %s222 = smul.u32 8, %s20
      %p223 = scmp.lt.s32.totalorder %s19, 1
      %s224 = scalar_select %p223, %s19, 1
      %p225 = scmp.lt.s32.totalorder %s222, 7
      %s226 = scalar_select %p225, %s222, 7
      %s227 = smul.addr %s226, 16
      %s228 = smul.addr %s224, 128
      %s229 = sadd.s32 %s227, %s228
      %s230 = smul.addr %s229, 2
      %s231 = scalar_lea.vmem %s0, %s230
      %p232 = pneg %p50
      %p233 = pneg %p47
      %s234 = sadd.s32 %s20, 1
      %s235 = smul.u32 %s234, 8
      %p236 = scmp.lt.s32.totalorder %s235, 7
      %s237 = scalar_select %p236, %s235, 7
      %p238 = scmp.lt.s32.totalorder %s19, 1
      %s239 = scalar_select %p238, %s19, 1
      %p240 = scmp.lt.s32.totalorder %s237, 7
      %s241 = scalar_select %p240, %s237, 7
      %s242 = smul.addr %s241, 16
      %s243 = smul.addr %s239, 128
      %s244 = sadd.s32 %s242, %s243
      %s245 = smul.addr %s244, 2
      %s246 = scalar_lea.vmem %s1, %s245
      %p247 = pneg %p86
      %p248 = pneg %p83
      %p249 = pneg %p107
      %p250 = pneg %p104
      %p251 = pneg %p128
      %p252 = pneg %p125
      %p253 = pneg %p156
      %p254 = pneg %p153
      %s255 = smul.u32 8, %s20
      %p256 = scmp.lt.s32.totalorder %s19, 1
      %s257 = scalar_select %p256, %s19, 1
      %p258 = scmp.lt.s32.totalorder %s255, 7
      %s259 = scalar_select %p258, %s255, 7
      %s260 = smul.addr %s257, 8
      %s261 = sadd.s32 %s259, %s260
      %s262 = smul.addr %s261, 8
      %s263 = scalar_lea.vmem %s4, %s262
      %s264 = smul.u32 8, %s20
      %p265 = scmp.lt.s32.totalorder %s19, 1
      %s266 = scalar_select %p265, %s19, 1
      %p267 = scmp.lt.s32.totalorder %s264, 7
      %s268 = scalar_select %p267, %s264, 7
      %s269 = smul.addr %s268, 16
      %s270 = smul.addr %s266, 128
      %s271 = sadd.s32 %s269, %s270
      %s272 = smul.addr %s271, 2
      %s273 = scalar_lea.vmem %s0, %s272
      %s274 = smul.u32 8, %s20
      %s275 = sadd.s32 %s20, 1
      %s276 = smul.u32 %s275, 8
      %p277 = scmp.lt.s32.totalorder %s276, 7
      %s278 = scalar_select %p277, %s276, 7
      %p279 = scmp.lt.s32.totalorder %s19, 1
      %s280 = scalar_select %p279, %s19, 1
      %p281 = scmp.lt.s32.totalorder %s278, 7
      %s282 = scalar_select %p281, %s278, 7
      %s283 = smul.addr %s282, 16
      %s284 = smul.addr %s280, 128
      %s285 = sadd.s32 %s283, %s284
      %s286 = smul.addr %s285, 2
      %s287 = scalar_lea.vmem %s1, %s286
      %s288 = sadd.s32 %s20, 1
      %s289 = smul.u32 %s288, 8
      %p290 = scmp.lt.s32.totalorder %s289, 7
      %s291 = scalar_select %p290, %s289, 7
      %s292 = smul.u32 8, %s20
      %p293 = scmp.lt.s32.totalorder %s19, 1
      %s294 = scalar_select %p293, %s19, 1
      %p295 = scmp.lt.s32.totalorder %s292, 7
      %s296 = scalar_select %p295, %s292, 7
      %s297 = smul.addr %s294, 8
      %s298 = sadd.s32 %s296, %s297
      %s299 = smul.addr %s298, 8
      %s300 = scalar_lea.vmem %s4, %s299
      %s301 = smul.u32 8, %s20
      %v302 = vld [vmem:[%s273] sm:$0x3]
      %v303 = vld [vmem:[%s273 + $0x2] sm:$0x3]
      %v304 = vld [vmem:[%s273 + $0x4] sm:$0x3]
      %v305 = vld [vmem:[%s273 + $0x6] sm:$0x3]
      %v306 = vld [vmem:[%s273 + $0x8] sm:$0x3]
      %v307 = vld [vmem:[%s273 + $0xa] sm:$0x3]
      %v308 = vld [vmem:[%s273 + $0xc] sm:$0x3]
      %v309 = vld [vmem:[%s273 + $0xe] sm:$0x3]
      %v310 = vld [vmem:[%s273 + $0x10] sm:$0x3]
      %v311 = vld [vmem:[%s273 + $0x12] sm:$0x3]
      %v312 = vld [vmem:[%s273 + $0x14] sm:$0x3]
      %v313 = vld [vmem:[%s273 + $0x16] sm:$0x3]
      %v314 = vld [vmem:[%s273 + $0x18] sm:$0x3]
      %v315 = vld [vmem:[%s273 + $0x1a] sm:$0x3]
      %v316 = vld [vmem:[%s273 + $0x1c] sm:$0x3]
      %v317 = vld [vmem:[%s273 + $0x1e] sm:$0x3]
      %v318 = vld [vmem:[%s273 + $0x20] sm:$0x3]
      %v319 = vld [vmem:[%s273 + $0x22] sm:$0x3]
      %v320 = vld [vmem:[%s273 + $0x24] sm:$0x3]
      %v321 = vld [vmem:[%s273 + $0x26] sm:$0x3]
      %v322 = vld [vmem:[%s273 + $0x28] sm:$0x3]
      %v323 = vld [vmem:[%s273 + $0x2a] sm:$0x3]
      %v324 = vld [vmem:[%s273 + $0x2c] sm:$0x3]
      %v325 = vld [vmem:[%s273 + $0x2e] sm:$0x3]
      %v326 = vld [vmem:[%s273 + $0x30] sm:$0x3]
      %v327 = vld [vmem:[%s273 + $0x32] sm:$0x3]
      %v328 = vld [vmem:[%s273 + $0x34] sm:$0x3]
      %v329 = vld [vmem:[%s273 + $0x36] sm:$0x3]
      %v330 = vld [vmem:[%s273 + $0x38] sm:$0x3]
      %v331 = vld [vmem:[%s273 + $0x3a] sm:$0x3]
      %v332 = vld [vmem:[%s273 + $0x3c] sm:$0x3]
      %v333 = vld [vmem:[%s273 + $0x3e] sm:$0x3]
      %v334 = vld [vmem:[%s273 + $0x40] sm:$0x3]
      %v335 = vld [vmem:[%s273 + $0x42] sm:$0x3]
      %v336 = vld [vmem:[%s273 + $0x44] sm:$0x3]
      %v337 = vld [vmem:[%s273 + $0x46] sm:$0x3]
      %v338 = vld [vmem:[%s273 + $0x48] sm:$0x3]
      %v339 = vld [vmem:[%s273 + $0x4a] sm:$0x3]
      %v340 = vld [vmem:[%s273 + $0x4c] sm:$0x3]
      %v341 = vld [vmem:[%s273 + $0x4e] sm:$0x3]
      %v342 = vld [vmem:[%s273 + $0x50] sm:$0x3]
      %v343 = vld [vmem:[%s273 + $0x52] sm:$0x3]
      %v344 = vld [vmem:[%s273 + $0x54] sm:$0x3]
      %v345 = vld [vmem:[%s273 + $0x56] sm:$0x3]
      %v346 = vld [vmem:[%s273 + $0x58] sm:$0x3]
      %v347 = vld [vmem:[%s273 + $0x5a] sm:$0x3]
      %v348 = vld [vmem:[%s273 + $0x5c] sm:$0x3]
      %v349 = vld [vmem:[%s273 + $0x5e] sm:$0x3]
      %v350 = vld [vmem:[%s273 + $0x60] sm:$0x3]
      %v351 = vld [vmem:[%s273 + $0x62] sm:$0x3]
      %v352 = vld [vmem:[%s273 + $0x64] sm:$0x3]
      %v353 = vld [vmem:[%s273 + $0x66] sm:$0x3]
      %v354 = vld [vmem:[%s273 + $0x68] sm:$0x3]
      %v355 = vld [vmem:[%s273 + $0x6a] sm:$0x3]
      %v356 = vld [vmem:[%s273 + $0x6c] sm:$0x3]
      %v357 = vld [vmem:[%s273 + $0x6e] sm:$0x3]
      %v358 = vld [vmem:[%s273 + $0x70] sm:$0x3]
      %v359 = vld [vmem:[%s273 + $0x72] sm:$0x3]
      %v360 = vld [vmem:[%s273 + $0x74] sm:$0x3]
      %v361 = vld [vmem:[%s273 + $0x76] sm:$0x3]
      %v362 = vld [vmem:[%s273 + $0x78] sm:$0x3]
      %v363 = vld [vmem:[%s273 + $0x7a] sm:$0x3]
      %v364 = vld [vmem:[%s273 + $0x7c] sm:$0x3]
      %v365 = vld [vmem:[%s273 + $0x7e] sm:$0x3]
      %v366 = vld [vmem:[%s273 + $0x80] sm:$0x3]
      %v367 = vld [vmem:[%s273 + $0x82] sm:$0x3]
      %v368 = vld [vmem:[%s273 + $0x84] sm:$0x3]
      %v369 = vld [vmem:[%s273 + $0x86] sm:$0x3]
      %v370 = vld [vmem:[%s273 + $0x88] sm:$0x3]
      %v371 = vld [vmem:[%s273 + $0x8a] sm:$0x3]
      %v372 = vld [vmem:[%s273 + $0x8c] sm:$0x3]
      %v373 = vld [vmem:[%s273 + $0x8e] sm:$0x3]
      %v374 = vld [vmem:[%s273 + $0x90] sm:$0x3]
      %v375 = vld [vmem:[%s273 + $0x92] sm:$0x3]
      %v376 = vld [vmem:[%s273 + $0x94] sm:$0x3]
      %v377 = vld [vmem:[%s273 + $0x96] sm:$0x3]
      %v378 = vld [vmem:[%s273 + $0x98] sm:$0x3]
      %v379 = vld [vmem:[%s273 + $0x9a] sm:$0x3]
      %v380 = vld [vmem:[%s273 + $0x9c] sm:$0x3]
      %v381 = vld [vmem:[%s273 + $0x9e] sm:$0x3]
      %v382 = vld [vmem:[%s273 + $0xa0] sm:$0x3]
      %v383 = vld [vmem:[%s273 + $0xa2] sm:$0x3]
      %v384 = vld [vmem:[%s273 + $0xa4] sm:$0x3]
      %v385 = vld [vmem:[%s273 + $0xa6] sm:$0x3]
      %v386 = vld [vmem:[%s273 + $0xa8] sm:$0x3]
      %v387 = vld [vmem:[%s273 + $0xaa] sm:$0x3]
      %v388 = vld [vmem:[%s273 + $0xac] sm:$0x3]
      %v389 = vld [vmem:[%s273 + $0xae] sm:$0x3]
      %v390 = vld [vmem:[%s273 + $0xb0] sm:$0x3]
      %v391 = vld [vmem:[%s273 + $0xb2] sm:$0x3]
      %v392 = vld [vmem:[%s273 + $0xb4] sm:$0x3]
      %v393 = vld [vmem:[%s273 + $0xb6] sm:$0x3]
      %v394 = vld [vmem:[%s273 + $0xb8] sm:$0x3]
      %v395 = vld [vmem:[%s273 + $0xba] sm:$0x3]
      %v396 = vld [vmem:[%s273 + $0xbc] sm:$0x3]
      %v397 = vld [vmem:[%s273 + $0xbe] sm:$0x3]
      %v398 = vld [vmem:[%s273 + $0xc0] sm:$0x3]
      %v399 = vld [vmem:[%s273 + $0xc2] sm:$0x3]
      %v400 = vld [vmem:[%s273 + $0xc4] sm:$0x3]
      %v401 = vld [vmem:[%s273 + $0xc6] sm:$0x3]
      %v402 = vld [vmem:[%s273 + $0xc8] sm:$0x3]
      %v403 = vld [vmem:[%s273 + $0xca] sm:$0x3]
      %v404 = vld [vmem:[%s273 + $0xcc] sm:$0x3]
      %v405 = vld [vmem:[%s273 + $0xce] sm:$0x3]
      %v406 = vld [vmem:[%s273 + $0xd0] sm:$0x3]
      %v407 = vld [vmem:[%s273 + $0xd2] sm:$0x3]
      %v408 = vld [vmem:[%s273 + $0xd4] sm:$0x3]
      %v409 = vld [vmem:[%s273 + $0xd6] sm:$0x3]
      %v410 = vld [vmem:[%s273 + $0xd8] sm:$0x3]
      %v411 = vld [vmem:[%s273 + $0xda] sm:$0x3]
      %v412 = vld [vmem:[%s273 + $0xdc] sm:$0x3]
      %v413 = vld [vmem:[%s273 + $0xde] sm:$0x3]
      %v414 = vld [vmem:[%s273 + $0xe0] sm:$0x3]
      %v415 = vld [vmem:[%s273 + $0xe2] sm:$0x3]
      %v416 = vld [vmem:[%s273 + $0xe4] sm:$0x3]
      %v417 = vld [vmem:[%s273 + $0xe6] sm:$0x3]
      %v418 = vld [vmem:[%s273 + $0xe8] sm:$0x3]
      %v419 = vld [vmem:[%s273 + $0xea] sm:$0x3]
      %v420 = vld [vmem:[%s273 + $0xec] sm:$0x3]
      %v421 = vld [vmem:[%s273 + $0xee] sm:$0x3]
      %v422 = vld [vmem:[%s273 + $0xf0] sm:$0x3]
      %v423 = vld [vmem:[%s273 + $0xf2] sm:$0x3]
      %v424 = vld [vmem:[%s273 + $0xf4] sm:$0x3]
      %v425 = vld [vmem:[%s273 + $0xf6] sm:$0x3]
      %v426 = vld [vmem:[%s273 + $0xf8] sm:$0x3]
      %v427 = vld [vmem:[%s273 + $0xfa] sm:$0x3]
      %v428 = vld [vmem:[%s273 + $0xfc] sm:$0x3]
      %v429 = vld [vmem:[%s273 + $0xfe] sm:$0x3]
      %v430 = vld [vmem:[%s287] sm:$0x3]
      %v431 = vld [vmem:[%s287 + $0x2] sm:$0x3]
      %v432 = vld [vmem:[%s287 + $0x4] sm:$0x3]
      %v433 = vld [vmem:[%s287 + $0x6] sm:$0x3]
      %v434 = vld [vmem:[%s287 + $0x8] sm:$0x3]
      %v435 = vld [vmem:[%s287 + $0xa] sm:$0x3]
      %v436 = vld [vmem:[%s287 + $0xc] sm:$0x3]
      %v437 = vld [vmem:[%s287 + $0xe] sm:$0x3]
      %p438 = scmp.eq.s32.totalorder %s20, 0
      %s439 = scalar_select %p438, 1, 0
      %v440 = vstv %s439
      %vm441 = vcmp.eq.s32.totalorder %v440, 1
      %v442 = vsel %vm441, 0.0, %v430
      %v443 = vsel %vm441, 0.0, %v431
      %v444 = vsel %vm441, 0.0, %v432
      %v445 = vsel %vm441, 0.0, %v433
      %v446 = vsel %vm441, 0.0, %v434
      %v447 = vsel %vm441, 0.0, %v435
      %v448 = vsel %vm441, 0.0, %v436
      %v449 = vsel %vm441, 0.0, %v437
      %v506 = vrot.slane %v304, 7
      %vm507 = vcmask 1041409
      %v508 = vsel %vm507, %v506, %v303
      %v509 = vrot.slane %v305, 6
      %vm510 = vcmask 1042434
      %v511 = vsel %vm510, %v509, %v508
      %v512 = vrot.slane %v306, 5
      %vm513 = vcmask 1043459
      %v514 = vsel %vm513, %v512, %v511
      %v515 = vrot.slane %v307, 4
      %vm516 = vcmask 1044484
      %v517 = vsel %vm516, %v515, %v514
      %v518 = vrot.slane %v308, 3
      %vm519 = vcmask 1045509
      %v520 = vsel %vm519, %v518, %v517
      %v521 = vrot.slane %v309, 2
      %vm522 = vcmask 1046534
      %v523 = vsel %vm522, %v521, %v520
      %v524 = vrot.slane %v320, 7
      %v525 = vsel %vm507, %v524, %v319
      %v526 = vrot.slane %v321, 6
      %v527 = vsel %vm510, %v526, %v525
      %v528 = vrot.slane %v322, 5
      %v529 = vsel %vm513, %v528, %v527
      %v530 = vrot.slane %v323, 4
      %v531 = vsel %vm516, %v530, %v529
      %v532 = vrot.slane %v324, 3
      %v533 = vsel %vm519, %v532, %v531
      %v534 = vrot.slane %v325, 2
      %v535 = vsel %vm522, %v534, %v533
      %v536 = vrot.slane %v336, 7
      %v537 = vsel %vm507, %v536, %v335
      %v538 = vrot.slane %v337, 6
      %v539 = vsel %vm510, %v538, %v537
      %v540 = vrot.slane %v338, 5
      %v541 = vsel %vm513, %v540, %v539
      %v542 = vrot.slane %v339, 4
      %v543 = vsel %vm516, %v542, %v541
      %v544 = vrot.slane %v340, 3
      %v545 = vsel %vm519, %v544, %v543
      %v546 = vrot.slane %v341, 2
      %v547 = vsel %vm522, %v546, %v545
      %v548 = vrot.slane %v352, 7
      %v549 = vsel %vm507, %v548, %v351
      %v550 = vrot.slane %v353, 6
      %v551 = vsel %vm510, %v550, %v549
      %v552 = vrot.slane %v354, 5
      %v553 = vsel %vm513, %v552, %v551
      %v554 = vrot.slane %v355, 4
      %v555 = vsel %vm516, %v554, %v553
      %v556 = vrot.slane %v356, 3
      %v557 = vsel %vm519, %v556, %v555
      %v558 = vrot.slane %v357, 2
      %v559 = vsel %vm522, %v558, %v557
      %v560 = vrot.slane %v368, 7
      %v561 = vsel %vm507, %v560, %v367
      %v562 = vrot.slane %v369, 6
      %v563 = vsel %vm510, %v562, %v561
      %v564 = vrot.slane %v370, 5
      %v565 = vsel %vm513, %v564, %v563
      %v566 = vrot.slane %v371, 4
      %v567 = vsel %vm516, %v566, %v565
      %v568 = vrot.slane %v372, 3
      %v569 = vsel %vm519, %v568, %v567
      %v570 = vrot.slane %v373, 2
      %v571 = vsel %vm522, %v570, %v569
      %v572 = vrot.slane %v384, 7
      %v573 = vsel %vm507, %v572, %v383
      %v574 = vrot.slane %v385, 6
      %v575 = vsel %vm510, %v574, %v573
      %v576 = vrot.slane %v386, 5
      %v577 = vsel %vm513, %v576, %v575
      %v578 = vrot.slane %v387, 4
      %v579 = vsel %vm516, %v578, %v577
      %v580 = vrot.slane %v388, 3
      %v581 = vsel %vm519, %v580, %v579
      %v582 = vrot.slane %v389, 2
      %v583 = vsel %vm522, %v582, %v581
      %v584 = vrot.slane %v400, 7
      %v585 = vsel %vm507, %v584, %v399
      %v586 = vrot.slane %v401, 6
      %v587 = vsel %vm510, %v586, %v585
      %v588 = vrot.slane %v402, 5
      %v589 = vsel %vm513, %v588, %v587
      %v590 = vrot.slane %v403, 4
      %v591 = vsel %vm516, %v590, %v589
      %v592 = vrot.slane %v404, 3
      %v593 = vsel %vm519, %v592, %v591
      %v594 = vrot.slane %v405, 2
      %v595 = vsel %vm522, %v594, %v593
      %v596 = vrot.slane %v416, 7
      %v597 = vsel %vm507, %v596, %v415
      %v598 = vrot.slane %v417, 6
      %v599 = vsel %vm510, %v598, %v597
      %v600 = vrot.slane %v418, 5
      %v601 = vsel %vm513, %v600, %v599
      %v602 = vrot.slane %v419, 4
      %v603 = vsel %vm516, %v602, %v601
      %v604 = vrot.slane %v420, 3
      %v605 = vsel %vm519, %v604, %v603
      %v606 = vrot.slane %v421, 2
      %v607 = vsel %vm522, %v606, %v605
      %vm616 = vcmask 1046528
      %v617 = vsel %vm616, %v523, 0.0
      %v618 = vsel %vm616, %v535, 0.0
      %v619 = vsel %vm616, %v547, 0.0
      %v620 = vsel %vm616, %v559, 0.0
      %v621 = vsel %vm616, %v571, 0.0
      %v622 = vsel %vm616, %v583, 0.0
      %v623 = vsel %vm616, %v595, 0.0
      %v624 = vsel %vm616, %v607, 0.0
      %v625 = vld [vmem:[%s2] sm:$0xf]
      %s626 = scalar_lea.vmem %s2, 4
      %v627 = vld [vmem:[%s626] sm:$0xf]
      %v636 = vrot.slane %v302, 1
      %v637 = vsel %vm507, %v303, %v636
      %v638 = vsel %vm510, %v506, %v637
      %v639 = vsel %vm513, %v509, %v638
      %v640 = vsel %vm516, %v512, %v639
      %v641 = vsel %vm519, %v515, %v640
      %v642 = vsel %vm522, %v518, %v641
      %vm643 = vcmask 1047559
      %v644 = vsel %vm643, %v521, %v642
      %v645 = vrot.slane %v318, 1
      %v646 = vsel %vm507, %v319, %v645
      %v647 = vsel %vm510, %v524, %v646
      %v648 = vsel %vm513, %v526, %v647
      %v649 = vsel %vm516, %v528, %v648
      %v650 = vsel %vm519, %v530, %v649
      %v651 = vsel %vm522, %v532, %v650
      %v652 = vsel %vm643, %v534, %v651
      %v653 = vrot.slane %v334, 1
      %v654 = vsel %vm507, %v335, %v653
      %v655 = vsel %vm510, %v536, %v654
      %v656 = vsel %vm513, %v538, %v655
      %v657 = vsel %vm516, %v540, %v656
      %v658 = vsel %vm519, %v542, %v657
      %v659 = vsel %vm522, %v544, %v658
      %v660 = vsel %vm643, %v546, %v659
      %v661 = vrot.slane %v350, 1
      %v662 = vsel %vm507, %v351, %v661
      %v663 = vsel %vm510, %v548, %v662
      %v664 = vsel %vm513, %v550, %v663
      %v665 = vsel %vm516, %v552, %v664
      %v666 = vsel %vm519, %v554, %v665
      %v667 = vsel %vm522, %v556, %v666
      %v668 = vsel %vm643, %v558, %v667
      %v669 = vrot.slane %v366, 1
      %v670 = vsel %vm507, %v367, %v669
      %v671 = vsel %vm510, %v560, %v670
      %v672 = vsel %vm513, %v562, %v671
      %v673 = vsel %vm516, %v564, %v672
      %v674 = vsel %vm519, %v566, %v673
      %v675 = vsel %vm522, %v568, %v674
      %v676 = vsel %vm643, %v570, %v675
      %v677 = vrot.slane %v382, 1
      %v678 = vsel %vm507, %v383, %v677
      %v679 = vsel %vm510, %v572, %v678
      %v680 = vsel %vm513, %v574, %v679
      %v681 = vsel %vm516, %v576, %v680
      %v682 = vsel %vm519, %v578, %v681
      %v683 = vsel %vm522, %v580, %v682
      %v684 = vsel %vm643, %v582, %v683
      %v685 = vrot.slane %v398, 1
      %v686 = vsel %vm507, %v399, %v685
      %v687 = vsel %vm510, %v584, %v686
      %v688 = vsel %vm513, %v586, %v687
      %v689 = vsel %vm516, %v588, %v688
      %v690 = vsel %vm519, %v590, %v689
      %v691 = vsel %vm522, %v592, %v690
      %v692 = vsel %vm643, %v594, %v691
      %v693 = vrot.slane %v414, 1
      %v694 = vsel %vm507, %v415, %v693
      %v695 = vsel %vm510, %v596, %v694
      %v696 = vsel %vm513, %v598, %v695
      %v697 = vsel %vm516, %v600, %v696
      %v698 = vsel %vm519, %v602, %v697
      %v699 = vsel %vm522, %v604, %v698
      %v700 = vsel %vm643, %v606, %v699
      %vm701 = vcmask 31744
      %v702 = vsel %vm701, %v644, 0
      %v704 = vsel %vm701, %v652, 0
      %v706 = vsel %vm701, %v660, 0
      %v708 = vsel %vm701, %v668, 0
      %v710 = vsel %vm701, %v676, 0
      %v712 = vsel %vm701, %v684, 0
      %v714 = vsel %vm701, %v692, 0
      %v716 = vsel %vm701, %v700, 0
      %vm718 = vcmask 1043456
      %v720 = vsel %vm718, %v627, 0
      %722 = vmatpush.msra.mxu0 0.0
      %723 = vmatpush.msra.mxu0 0.0
      %724 = vmatpush.msra.mxu0 0.0
      %725 = vmatpush.msra.mxu0 0.0
      %726 = vmatpush.msra.mxu0 0.0
      %727 = vmatpush.msra.mxu0 0.0
      %728 = vmatpush.msra.mxu0 0.0
      %729 = vmatpush.msra.mxu0 0.0
      %730 = vmatpush.msra.mxu0 0.0
      %731 = vmatpush.msra.mxu0 0.0
      %732 = vmatpush.msra.mxu0 0.0
      %733 = vmatpush.msra.mxu0 0.0
      %734 = vmatpush.msra.mxu0 0.0
      %735 = vmatpush.msra.mxu0 0.0
      %736 = vmatpush.msra.mxu0 0.0
      %737 = vmatpush.msra.mxu0 %v720
      %738 = vmatmul.f32.gmra.mxu0 %v702
      %v739 = vpop.f32.mrf.mxu0
      %v740 = vadd.f32 0.0, %v739
      %741 = vmatmul.f32.gmra.mxu0 %v704
      %v742 = vpop.f32.mrf.mxu0
      %v743 = vadd.f32 0.0, %v742
      %744 = vmatmul.f32.gmra.mxu0 %v706
      %v745 = vpop.f32.mrf.mxu0
      %v746 = vadd.f32 0.0, %v745
      %747 = vmatmul.f32.gmra.mxu0 %v708
      %v748 = vpop.f32.mrf.mxu0
      %v749 = vadd.f32 0.0, %v748
      %750 = vmatmul.f32.gmra.mxu0 %v710
      %v751 = vpop.f32.mrf.mxu0
      %v752 = vadd.f32 0.0, %v751
      %753 = vmatmul.f32.gmra.mxu0 %v712
      %v754 = vpop.f32.mrf.mxu0
      %v755 = vadd.f32 0.0, %v754
      %756 = vmatmul.f32.gmra.mxu0 %v714
      %v757 = vpop.f32.mrf.mxu0
      %v758 = vadd.f32 0.0, %v757
      %759 = vmatmul.f32.gmra.mxu0 %v716
      %v760 = vpop.f32.mrf.mxu0
      %v761 = vadd.f32 0.0, %v760
      %762 = vdwg.mxu0
      %v763 = vrot.slane %v303, 7
      %v764 = vsel %vm507, %v763, %v302
      %v765 = vrot.slane %v304, 6
      %v766 = vsel %vm510, %v765, %v764
      %v767 = vrot.slane %v305, 5
      %v768 = vsel %vm513, %v767, %v766
      %v769 = vrot.slane %v306, 4
      %v770 = vsel %vm516, %v769, %v768
      %v771 = vrot.slane %v307, 3
      %v772 = vsel %vm519, %v771, %v770
      %v773 = vrot.slane %v308, 2
      %v774 = vsel %vm522, %v773, %v772
      %v775 = vrot.slane %v309, 1
      %v776 = vsel %vm643, %v775, %v774
      %v777 = vrot.slane %v319, 7
      %v778 = vsel %vm507, %v777, %v318
      %v779 = vrot.slane %v320, 6
      %v780 = vsel %vm510, %v779, %v778
      %v781 = vrot.slane %v321, 5
      %v782 = vsel %vm513, %v781, %v780
      %v783 = vrot.slane %v322, 4
      %v784 = vsel %vm516, %v783, %v782
      %v785 = vrot.slane %v323, 3
      %v786 = vsel %vm519, %v785, %v784
      %v787 = vrot.slane %v324, 2
      %v788 = vsel %vm522, %v787, %v786
      %v789 = vrot.slane %v325, 1
      %v790 = vsel %vm643, %v789, %v788
      %v791 = vrot.slane %v335, 7
      %v792 = vsel %vm507, %v791, %v334
      %v793 = vrot.slane %v336, 6
      %v794 = vsel %vm510, %v793, %v792
      %v795 = vrot.slane %v337, 5
      %v796 = vsel %vm513, %v795, %v794
      %v797 = vrot.slane %v338, 4
      %v798 = vsel %vm516, %v797, %v796
      %v799 = vrot.slane %v339, 3
      %v800 = vsel %vm519, %v799, %v798
      %v801 = vrot.slane %v340, 2
      %v802 = vsel %vm522, %v801, %v800
      %v803 = vrot.slane %v341, 1
      %v804 = vsel %vm643, %v803, %v802
      %v805 = vrot.slane %v351, 7
      %v806 = vsel %vm507, %v805, %v350
      %v807 = vrot.slane %v352, 6
      %v808 = vsel %vm510, %v807, %v806
      %v809 = vrot.slane %v353, 5
      %v810 = vsel %vm513, %v809, %v808
      %v811 = vrot.slane %v354, 4
      %v812 = vsel %vm516, %v811, %v810
      %v813 = vrot.slane %v355, 3
      %v814 = vsel %vm519, %v813, %v812
      %v815 = vrot.slane %v356, 2
      %v816 = vsel %vm522, %v815, %v814
      %v817 = vrot.slane %v357, 1
      %v818 = vsel %vm643, %v817, %v816
      %v819 = vrot.slane %v367, 7
      %v820 = vsel %vm507, %v819, %v366
      %v821 = vrot.slane %v368, 6
      %v822 = vsel %vm510, %v821, %v820
      %v823 = vrot.slane %v369, 5
      %v824 = vsel %vm513, %v823, %v822
      %v825 = vrot.slane %v370, 4
      %v826 = vsel %vm516, %v825, %v824
      %v827 = vrot.slane %v371, 3
      %v828 = vsel %vm519, %v827, %v826
      %v829 = vrot.slane %v372, 2
      %v830 = vsel %vm522, %v829, %v828
      %v831 = vrot.slane %v373, 1
      %v832 = vsel %vm643, %v831, %v830
      %v833 = vrot.slane %v383, 7
      %v834 = vsel %vm507, %v833, %v382
      %v835 = vrot.slane %v384, 6
      %v836 = vsel %vm510, %v835, %v834
      %v837 = vrot.slane %v385, 5
      %v838 = vsel %vm513, %v837, %v836
      %v839 = vrot.slane %v386, 4
      %v840 = vsel %vm516, %v839, %v838
      %v841 = vrot.slane %v387, 3
      %v842 = vsel %vm519, %v841, %v840
      %v843 = vrot.slane %v388, 2
      %v844 = vsel %vm522, %v843, %v842
      %v845 = vrot.slane %v389, 1
      %v846 = vsel %vm643, %v845, %v844
      %v847 = vrot.slane %v399, 7
      %v848 = vsel %vm507, %v847, %v398
      %v849 = vrot.slane %v400, 6
      %v850 = vsel %vm510, %v849, %v848
      %v851 = vrot.slane %v401, 5
      %v852 = vsel %vm513, %v851, %v850
      %v853 = vrot.slane %v402, 4
      %v854 = vsel %vm516, %v853, %v852
      %v855 = vrot.slane %v403, 3
      %v856 = vsel %vm519, %v855, %v854
      %v857 = vrot.slane %v404, 2
      %v858 = vsel %vm522, %v857, %v856
      %v859 = vrot.slane %v405, 1
      %v860 = vsel %vm643, %v859, %v858
      %v861 = vrot.slane %v415, 7
      %v862 = vsel %vm507, %v861, %v414
      %v863 = vrot.slane %v416, 6
      %v864 = vsel %vm510, %v863, %v862
      %v865 = vrot.slane %v417, 5
      %v866 = vsel %vm513, %v865, %v864
      %v867 = vrot.slane %v418, 4
      %v868 = vsel %vm516, %v867, %v866
      %v869 = vrot.slane %v419, 3
      %v870 = vsel %vm519, %v869, %v868
      %v871 = vrot.slane %v420, 2
      %v872 = vsel %vm522, %v871, %v870
      %v873 = vrot.slane %v421, 1
      %v874 = vsel %vm643, %v873, %v872
      %v875 = vsel %vm701, %v776, 0
      %v877 = vsel %vm701, %v790, 0
      %v879 = vsel %vm701, %v804, 0
      %v881 = vsel %vm701, %v818, 0
      %v883 = vsel %vm701, %v832, 0
      %v885 = vsel %vm701, %v846, 0
      %v887 = vsel %vm701, %v860, 0
      %v889 = vsel %vm701, %v874, 0
      %v892 = vsel %vm718, %v625, 0
      %894 = vmatpush.msra.mxu0 0.0
      %895 = vmatpush.msra.mxu0 0.0
      %896 = vmatpush.msra.mxu0 0.0
      %897 = vmatpush.msra.mxu0 0.0
      %898 = vmatpush.msra.mxu0 0.0
      %899 = vmatpush.msra.mxu0 0.0
      %900 = vmatpush.msra.mxu0 0.0
      %901 = vmatpush.msra.mxu0 0.0
      %902 = vmatpush.msra.mxu0 0.0
      %903 = vmatpush.msra.mxu0 0.0
      %904 = vmatpush.msra.mxu0 0.0
      %905 = vmatpush.msra.mxu0 0.0
      %906 = vmatpush.msra.mxu0 0.0
      %907 = vmatpush.msra.mxu0 0.0
      %908 = vmatpush.msra.mxu0 0.0
      %909 = vmatpush.msra.mxu0 %v892
      %910 = vmatmul.f32.gmra.mxu0 %v875
      %v911 = vpop.f32.mrf.mxu0
      %v912 = vadd.f32 %v740, %v911
      %913 = vmatmul.f32.gmra.mxu0 %v877
      %v914 = vpop.f32.mrf.mxu0
      %v915 = vadd.f32 %v743, %v914
      %916 = vmatmul.f32.gmra.mxu0 %v879
      %v917 = vpop.f32.mrf.mxu0
      %v918 = vadd.f32 %v746, %v917
      %919 = vmatmul.f32.gmra.mxu0 %v881
      %v920 = vpop.f32.mrf.mxu0
      %v921 = vadd.f32 %v749, %v920
      %922 = vmatmul.f32.gmra.mxu0 %v883
      %v923 = vpop.f32.mrf.mxu0
      %v924 = vadd.f32 %v752, %v923
      %925 = vmatmul.f32.gmra.mxu0 %v885
      %v926 = vpop.f32.mrf.mxu0
      %v927 = vadd.f32 %v755, %v926
      %928 = vmatmul.f32.gmra.mxu0 %v887
      %v929 = vpop.f32.mrf.mxu0
      %v930 = vadd.f32 %v758, %v929
      %931 = vmatmul.f32.gmra.mxu0 %v889
      %v932 = vpop.f32.mrf.mxu0
      %v933 = vadd.f32 %v761, %v932
      %934 = vdwg.mxu0
      %s935 = scalar_lea.vmem %s2, 8
      %v936 = vld [vmem:[%s935] sm:$0xf]
      %v938 = vsel %vm701, %v617, 0
      %v941 = vsel %vm701, %v618, 0
      %v944 = vsel %vm701, %v619, 0
      %v947 = vsel %vm701, %v620, 0
      %v950 = vsel %vm701, %v621, 0
      %v953 = vsel %vm701, %v622, 0
      %v956 = vsel %vm701, %v623, 0
      %v959 = vsel %vm701, %v624, 0
      %v962 = vsel %vm718, %v936, 0
      %964 = vmatpush.msra.mxu0 0.0
      %965 = vmatpush.msra.mxu0 0.0
      %966 = vmatpush.msra.mxu0 0.0
      %967 = vmatpush.msra.mxu0 0.0
      %968 = vmatpush.msra.mxu0 0.0
      %969 = vmatpush.msra.mxu0 0.0
      %970 = vmatpush.msra.mxu0 0.0
      %971 = vmatpush.msra.mxu0 0.0
      %972 = vmatpush.msra.mxu0 0.0
      %973 = vmatpush.msra.mxu0 0.0
      %974 = vmatpush.msra.mxu0 0.0
      %975 = vmatpush.msra.mxu0 0.0
      %976 = vmatpush.msra.mxu0 0.0
      %977 = vmatpush.msra.mxu0 0.0
      %978 = vmatpush.msra.mxu0 0.0
      %979 = vmatpush.msra.mxu0 %v962
      %980 = vmatmul.f32.gmra.mxu0 %v938
      %v981 = vpop.f32.mrf.mxu0
      %v982 = vadd.f32 0.0, %v981
      %983 = vmatmul.f32.gmra.mxu0 %v941
      %v984 = vpop.f32.mrf.mxu0
      %v985 = vadd.f32 0.0, %v984
      %986 = vmatmul.f32.gmra.mxu0 %v944
      %v987 = vpop.f32.mrf.mxu0
      %v988 = vadd.f32 0.0, %v987
      %989 = vmatmul.f32.gmra.mxu0 %v947
      %v990 = vpop.f32.mrf.mxu0
      %v991 = vadd.f32 0.0, %v990
      %992 = vmatmul.f32.gmra.mxu0 %v950
      %v993 = vpop.f32.mrf.mxu0
      %v994 = vadd.f32 0.0, %v993
      %995 = vmatmul.f32.gmra.mxu0 %v953
      %v996 = vpop.f32.mrf.mxu0
      %v997 = vadd.f32 0.0, %v996
      %998 = vmatmul.f32.gmra.mxu0 %v956
      %v999 = vpop.f32.mrf.mxu0
      %v1000 = vadd.f32 0.0, %v999
      %1001 = vmatmul.f32.gmra.mxu0 %v959
      %v1002 = vpop.f32.mrf.mxu0
      %v1003 = vadd.f32 0.0, %v1002
      %1004 = vdwg.mxu0
      %v1005 = vadd.f32 %v912, %v982
      %v1006 = vadd.f32 %v915, %v985
      %v1007 = vadd.f32 %v918, %v988
      %v1008 = vadd.f32 %v921, %v991
      %v1009 = vadd.f32 %v924, %v994
      %v1010 = vadd.f32 %v927, %v997
      %v1011 = vadd.f32 %v930, %v1000
      %v1012 = vadd.f32 %v933, %v1003
      %v1069 = vrot.slane %v312, 7
      %v1070 = vsel %vm507, %v1069, %v311
      %v1071 = vrot.slane %v313, 6
      %v1072 = vsel %vm510, %v1071, %v1070
      %v1073 = vrot.slane %v314, 5
      %v1074 = vsel %vm513, %v1073, %v1072
      %v1075 = vrot.slane %v315, 4
      %v1076 = vsel %vm516, %v1075, %v1074
      %v1077 = vrot.slane %v316, 3
      %v1078 = vsel %vm519, %v1077, %v1076
      %v1079 = vrot.slane %v317, 2
      %v1080 = vsel %vm522, %v1079, %v1078
      %v1081 = vrot.slane %v328, 7
      %v1082 = vsel %vm507, %v1081, %v327
      %v1083 = vrot.slane %v329, 6
      %v1084 = vsel %vm510, %v1083, %v1082
      %v1085 = vrot.slane %v330, 5
      %v1086 = vsel %vm513, %v1085, %v1084
      %v1087 = vrot.slane %v331, 4
      %v1088 = vsel %vm516, %v1087, %v1086
      %v1089 = vrot.slane %v332, 3
      %v1090 = vsel %vm519, %v1089, %v1088
      %v1091 = vrot.slane %v333, 2
      %v1092 = vsel %vm522, %v1091, %v1090
      %v1093 = vrot.slane %v344, 7
      %v1094 = vsel %vm507, %v1093, %v343
      %v1095 = vrot.slane %v345, 6
      %v1096 = vsel %vm510, %v1095, %v1094
      %v1097 = vrot.slane %v346, 5
      %v1098 = vsel %vm513, %v1097, %v1096
      %v1099 = vrot.slane %v347, 4
      %v1100 = vsel %vm516, %v1099, %v1098
      %v1101 = vrot.slane %v348, 3
      %v1102 = vsel %vm519, %v1101, %v1100
      %v1103 = vrot.slane %v349, 2
      %v1104 = vsel %vm522, %v1103, %v1102
      %v1105 = vrot.slane %v360, 7
      %v1106 = vsel %vm507, %v1105, %v359
      %v1107 = vrot.slane %v361, 6
      %v1108 = vsel %vm510, %v1107, %v1106
      %v1109 = vrot.slane %v362, 5
      %v1110 = vsel %vm513, %v1109, %v1108
      %v1111 = vrot.slane %v363, 4
      %v1112 = vsel %vm516, %v1111, %v1110
      %v1113 = vrot.slane %v364, 3
      %v1114 = vsel %vm519, %v1113, %v1112
      %v1115 = vrot.slane %v365, 2
      %v1116 = vsel %vm522, %v1115, %v1114
      %v1117 = vrot.slane %v376, 7
      %v1118 = vsel %vm507, %v1117, %v375
      %v1119 = vrot.slane %v377, 6
      %v1120 = vsel %vm510, %v1119, %v1118
      %v1121 = vrot.slane %v378, 5
      %v1122 = vsel %vm513, %v1121, %v1120
      %v1123 = vrot.slane %v379, 4
      %v1124 = vsel %vm516, %v1123, %v1122
      %v1125 = vrot.slane %v380, 3
      %v1126 = vsel %vm519, %v1125, %v1124
      %v1127 = vrot.slane %v381, 2
      %v1128 = vsel %vm522, %v1127, %v1126
      %v1129 = vrot.slane %v392, 7
      %v1130 = vsel %vm507, %v1129, %v391
      %v1131 = vrot.slane %v393, 6
      %v1132 = vsel %vm510, %v1131, %v1130
      %v1133 = vrot.slane %v394, 5
      %v1134 = vsel %vm513, %v1133, %v1132
      %v1135 = vrot.slane %v395, 4
      %v1136 = vsel %vm516, %v1135, %v1134
      %v1137 = vrot.slane %v396, 3
      %v1138 = vsel %vm519, %v1137, %v1136
      %v1139 = vrot.slane %v397, 2
      %v1140 = vsel %vm522, %v1139, %v1138
      %v1141 = vrot.slane %v408, 7
      %v1142 = vsel %vm507, %v1141, %v407
      %v1143 = vrot.slane %v409, 6
      %v1144 = vsel %vm510, %v1143, %v1142
      %v1145 = vrot.slane %v410, 5
      %v1146 = vsel %vm513, %v1145, %v1144
      %v1147 = vrot.slane %v411, 4
      %v1148 = vsel %vm516, %v1147, %v1146
      %v1149 = vrot.slane %v412, 3
      %v1150 = vsel %vm519, %v1149, %v1148
      %v1151 = vrot.slane %v413, 2
      %v1152 = vsel %vm522, %v1151, %v1150
      %v1153 = vrot.slane %v424, 7
      %v1154 = vsel %vm507, %v1153, %v423
      %v1155 = vrot.slane %v425, 6
      %v1156 = vsel %vm510, %v1155, %v1154
      %v1157 = vrot.slane %v426, 5
      %v1158 = vsel %vm513, %v1157, %v1156
      %v1159 = vrot.slane %v427, 4
      %v1160 = vsel %vm516, %v1159, %v1158
      %v1161 = vrot.slane %v428, 3
      %v1162 = vsel %vm519, %v1161, %v1160
      %v1163 = vrot.slane %v429, 2
      %v1164 = vsel %vm522, %v1163, %v1162
      %v1173 = vsel %vm616, %v1080, 0.0
      %v1174 = vsel %vm616, %v1092, 0.0
      %v1175 = vsel %vm616, %v1104, 0.0
      %v1176 = vsel %vm616, %v1116, 0.0
      %v1177 = vsel %vm616, %v1128, 0.0
      %v1178 = vsel %vm616, %v1140, 0.0
      %v1179 = vsel %vm616, %v1152, 0.0
      %v1180 = vsel %vm616, %v1164, 0.0
      %s1181 = scalar_lea.vmem %s2, 12
      %v1182 = vld [vmem:[%s1181] sm:$0xf]
      %v1191 = vrot.slane %v311, 7
      %v1192 = vsel %vm507, %v1191, %v310
      %v1193 = vrot.slane %v312, 6
      %v1194 = vsel %vm510, %v1193, %v1192
      %v1195 = vrot.slane %v313, 5
      %v1196 = vsel %vm513, %v1195, %v1194
      %v1197 = vrot.slane %v314, 4
      %v1198 = vsel %vm516, %v1197, %v1196
      %v1199 = vrot.slane %v315, 3
      %v1200 = vsel %vm519, %v1199, %v1198
      %v1201 = vrot.slane %v316, 2
      %v1202 = vsel %vm522, %v1201, %v1200
      %v1203 = vrot.slane %v317, 1
      %v1204 = vsel %vm643, %v1203, %v1202
      %v1205 = vrot.slane %v327, 7
      %v1206 = vsel %vm507, %v1205, %v326
      %v1207 = vrot.slane %v328, 6
      %v1208 = vsel %vm510, %v1207, %v1206
      %v1209 = vrot.slane %v329, 5
      %v1210 = vsel %vm513, %v1209, %v1208
      %v1211 = vrot.slane %v330, 4
      %v1212 = vsel %vm516, %v1211, %v1210
      %v1213 = vrot.slane %v331, 3
      %v1214 = vsel %vm519, %v1213, %v1212
      %v1215 = vrot.slane %v332, 2
      %v1216 = vsel %vm522, %v1215, %v1214
      %v1217 = vrot.slane %v333, 1
      %v1218 = vsel %vm643, %v1217, %v1216
      %v1219 = vrot.slane %v343, 7
      %v1220 = vsel %vm507, %v1219, %v342
      %v1221 = vrot.slane %v344, 6
      %v1222 = vsel %vm510, %v1221, %v1220
      %v1223 = vrot.slane %v345, 5
      %v1224 = vsel %vm513, %v1223, %v1222
      %v1225 = vrot.slane %v346, 4
      %v1226 = vsel %vm516, %v1225, %v1224
      %v1227 = vrot.slane %v347, 3
      %v1228 = vsel %vm519, %v1227, %v1226
      %v1229 = vrot.slane %v348, 2
      %v1230 = vsel %vm522, %v1229, %v1228
      %v1231 = vrot.slane %v349, 1
      %v1232 = vsel %vm643, %v1231, %v1230
      %v1233 = vrot.slane %v359, 7
      %v1234 = vsel %vm507, %v1233, %v358
      %v1235 = vrot.slane %v360, 6
      %v1236 = vsel %vm510, %v1235, %v1234
      %v1237 = vrot.slane %v361, 5
      %v1238 = vsel %vm513, %v1237, %v1236
      %v1239 = vrot.slane %v362, 4
      %v1240 = vsel %vm516, %v1239, %v1238
      %v1241 = vrot.slane %v363, 3
      %v1242 = vsel %vm519, %v1241, %v1240
      %v1243 = vrot.slane %v364, 2
      %v1244 = vsel %vm522, %v1243, %v1242
      %v1245 = vrot.slane %v365, 1
      %v1246 = vsel %vm643, %v1245, %v1244
      %v1247 = vrot.slane %v375, 7
      %v1248 = vsel %vm507, %v1247, %v374
      %v1249 = vrot.slane %v376, 6
      %v1250 = vsel %vm510, %v1249, %v1248
      %v1251 = vrot.slane %v377, 5
      %v1252 = vsel %vm513, %v1251, %v1250
      %v1253 = vrot.slane %v378, 4
      %v1254 = vsel %vm516, %v1253, %v1252
      %v1255 = vrot.slane %v379, 3
      %v1256 = vsel %vm519, %v1255, %v1254
      %v1257 = vrot.slane %v380, 2
      %v1258 = vsel %vm522, %v1257, %v1256
      %v1259 = vrot.slane %v381, 1
      %v1260 = vsel %vm643, %v1259, %v1258
      %v1261 = vrot.slane %v391, 7
      %v1262 = vsel %vm507, %v1261, %v390
      %v1263 = vrot.slane %v392, 6
      %v1264 = vsel %vm510, %v1263, %v1262
      %v1265 = vrot.slane %v393, 5
      %v1266 = vsel %vm513, %v1265, %v1264
      %v1267 = vrot.slane %v394, 4
      %v1268 = vsel %vm516, %v1267, %v1266
      %v1269 = vrot.slane %v395, 3
      %v1270 = vsel %vm519, %v1269, %v1268
      %v1271 = vrot.slane %v396, 2
      %v1272 = vsel %vm522, %v1271, %v1270
      %v1273 = vrot.slane %v397, 1
      %v1274 = vsel %vm643, %v1273, %v1272
      %v1275 = vrot.slane %v407, 7
      %v1276 = vsel %vm507, %v1275, %v406
      %v1277 = vrot.slane %v408, 6
      %v1278 = vsel %vm510, %v1277, %v1276
      %v1279 = vrot.slane %v409, 5
      %v1280 = vsel %vm513, %v1279, %v1278
      %v1281 = vrot.slane %v410, 4
      %v1282 = vsel %vm516, %v1281, %v1280
      %v1283 = vrot.slane %v411, 3
      %v1284 = vsel %vm519, %v1283, %v1282
      %v1285 = vrot.slane %v412, 2
      %v1286 = vsel %vm522, %v1285, %v1284
      %v1287 = vrot.slane %v413, 1
      %v1288 = vsel %vm643, %v1287, %v1286
      %v1289 = vrot.slane %v423, 7
      %v1290 = vsel %vm507, %v1289, %v422
      %v1291 = vrot.slane %v424, 6
      %v1292 = vsel %vm510, %v1291, %v1290
      %v1293 = vrot.slane %v425, 5
      %v1294 = vsel %vm513, %v1293, %v1292
      %v1295 = vrot.slane %v426, 4
      %v1296 = vsel %vm516, %v1295, %v1294
      %v1297 = vrot.slane %v427, 3
      %v1298 = vsel %vm519, %v1297, %v1296
      %v1299 = vrot.slane %v428, 2
      %v1300 = vsel %vm522, %v1299, %v1298
      %v1301 = vrot.slane %v429, 1
      %v1302 = vsel %vm643, %v1301, %v1300
      %v1303 = vsel %vm701, %v1204, 0
      %v1305 = vsel %vm701, %v1218, 0
      %v1307 = vsel %vm701, %v1232, 0
      %v1309 = vsel %vm701, %v1246, 0
      %v1311 = vsel %vm701, %v1260, 0
      %v1313 = vsel %vm701, %v1274, 0
      %v1315 = vsel %vm701, %v1288, 0
      %v1317 = vsel %vm701, %v1302, 0
      %v1320 = vsel %vm718, %v1182, 0
      %1322 = vmatpush.msra.mxu0 0.0
      %1323 = vmatpush.msra.mxu0 0.0
      %1324 = vmatpush.msra.mxu0 0.0
      %1325 = vmatpush.msra.mxu0 0.0
      %1326 = vmatpush.msra.mxu0 0.0
      %1327 = vmatpush.msra.mxu0 0.0
      %1328 = vmatpush.msra.mxu0 0.0
      %1329 = vmatpush.msra.mxu0 0.0
      %1330 = vmatpush.msra.mxu0 0.0
      %1331 = vmatpush.msra.mxu0 0.0
      %1332 = vmatpush.msra.mxu0 0.0
      %1333 = vmatpush.msra.mxu0 0.0
      %1334 = vmatpush.msra.mxu0 0.0
      %1335 = vmatpush.msra.mxu0 0.0
      %1336 = vmatpush.msra.mxu0 0.0
      %1337 = vmatpush.msra.mxu0 %v1320
      %1338 = vmatmul.f32.gmra.mxu0 %v1303
      %v1339 = vpop.f32.mrf.mxu0
      %v1340 = vadd.f32 0.0, %v1339
      %1341 = vmatmul.f32.gmra.mxu0 %v1305
      %v1342 = vpop.f32.mrf.mxu0
      %v1343 = vadd.f32 0.0, %v1342
      %1344 = vmatmul.f32.gmra.mxu0 %v1307
      %v1345 = vpop.f32.mrf.mxu0
      %v1346 = vadd.f32 0.0, %v1345
      %1347 = vmatmul.f32.gmra.mxu0 %v1309
      %v1348 = vpop.f32.mrf.mxu0
      %v1349 = vadd.f32 0.0, %v1348
      %1350 = vmatmul.f32.gmra.mxu0 %v1311
      %v1351 = vpop.f32.mrf.mxu0
      %v1352 = vadd.f32 0.0, %v1351
      %1353 = vmatmul.f32.gmra.mxu0 %v1313
      %v1354 = vpop.f32.mrf.mxu0
      %v1355 = vadd.f32 0.0, %v1354
      %1356 = vmatmul.f32.gmra.mxu0 %v1315
      %v1357 = vpop.f32.mrf.mxu0
      %v1358 = vadd.f32 0.0, %v1357
      %1359 = vmatmul.f32.gmra.mxu0 %v1317
      %v1360 = vpop.f32.mrf.mxu0
      %v1361 = vadd.f32 0.0, %v1360
      %1362 = vdwg.mxu0
      %v1363 = vadd.f32 %v1005, %v1340
      %v1364 = vadd.f32 %v1006, %v1343
      %v1365 = vadd.f32 %v1007, %v1346
      %v1366 = vadd.f32 %v1008, %v1349
      %v1367 = vadd.f32 %v1009, %v1352
      %v1368 = vadd.f32 %v1010, %v1355
      %v1369 = vadd.f32 %v1011, %v1358
      %v1370 = vadd.f32 %v1012, %v1361
      %s1371 = scalar_lea.vmem %s2, 16
      %v1372 = vld [vmem:[%s1371] sm:$0xf]
      %v1373 = vrot.slane %v310, 1
      %v1374 = vsel %vm507, %v311, %v1373
      %v1375 = vsel %vm510, %v1069, %v1374
      %v1376 = vsel %vm513, %v1071, %v1375
      %v1377 = vsel %vm516, %v1073, %v1376
      %v1378 = vsel %vm519, %v1075, %v1377
      %v1379 = vsel %vm522, %v1077, %v1378
      %v1380 = vsel %vm643, %v1079, %v1379
      %v1381 = vrot.slane %v326, 1
      %v1382 = vsel %vm507, %v327, %v1381
      %v1383 = vsel %vm510, %v1081, %v1382
      %v1384 = vsel %vm513, %v1083, %v1383
      %v1385 = vsel %vm516, %v1085, %v1384
      %v1386 = vsel %vm519, %v1087, %v1385
      %v1387 = vsel %vm522, %v1089, %v1386
      %v1388 = vsel %vm643, %v1091, %v1387
      %v1389 = vrot.slane %v342, 1
      %v1390 = vsel %vm507, %v343, %v1389
      %v1391 = vsel %vm510, %v1093, %v1390
      %v1392 = vsel %vm513, %v1095, %v1391
      %v1393 = vsel %vm516, %v1097, %v1392
      %v1394 = vsel %vm519, %v1099, %v1393
      %v1395 = vsel %vm522, %v1101, %v1394
      %v1396 = vsel %vm643, %v1103, %v1395
      %v1397 = vrot.slane %v358, 1
      %v1398 = vsel %vm507, %v359, %v1397
      %v1399 = vsel %vm510, %v1105, %v1398
      %v1400 = vsel %vm513, %v1107, %v1399
      %v1401 = vsel %vm516, %v1109, %v1400
      %v1402 = vsel %vm519, %v1111, %v1401
      %v1403 = vsel %vm522, %v1113, %v1402
      %v1404 = vsel %vm643, %v1115, %v1403
      %v1405 = vrot.slane %v374, 1
      %v1406 = vsel %vm507, %v375, %v1405
      %v1407 = vsel %vm510, %v1117, %v1406
      %v1408 = vsel %vm513, %v1119, %v1407
      %v1409 = vsel %vm516, %v1121, %v1408
      %v1410 = vsel %vm519, %v1123, %v1409
      %v1411 = vsel %vm522, %v1125, %v1410
      %v1412 = vsel %vm643, %v1127, %v1411
      %v1413 = vrot.slane %v390, 1
      %v1414 = vsel %vm507, %v391, %v1413
      %v1415 = vsel %vm510, %v1129, %v1414
      %v1416 = vsel %vm513, %v1131, %v1415
      %v1417 = vsel %vm516, %v1133, %v1416
      %v1418 = vsel %vm519, %v1135, %v1417
      %v1419 = vsel %vm522, %v1137, %v1418
      %v1420 = vsel %vm643, %v1139, %v1419
      %v1421 = vrot.slane %v406, 1
      %v1422 = vsel %vm507, %v407, %v1421
      %v1423 = vsel %vm510, %v1141, %v1422
      %v1424 = vsel %vm513, %v1143, %v1423
      %v1425 = vsel %vm516, %v1145, %v1424
      %v1426 = vsel %vm519, %v1147, %v1425
      %v1427 = vsel %vm522, %v1149, %v1426
      %v1428 = vsel %vm643, %v1151, %v1427
      %v1429 = vrot.slane %v422, 1
      %v1430 = vsel %vm507, %v423, %v1429
      %v1431 = vsel %vm510, %v1153, %v1430
      %v1432 = vsel %vm513, %v1155, %v1431
      %v1433 = vsel %vm516, %v1157, %v1432
      %v1434 = vsel %vm519, %v1159, %v1433
      %v1435 = vsel %vm522, %v1161, %v1434
      %v1436 = vsel %vm643, %v1163, %v1435
      %v1437 = vsel %vm701, %v1380, 0
      %v1439 = vsel %vm701, %v1388, 0
      %v1441 = vsel %vm701, %v1396, 0
      %v1443 = vsel %vm701, %v1404, 0
      %v1445 = vsel %vm701, %v1412, 0
      %v1447 = vsel %vm701, %v1420, 0
      %v1449 = vsel %vm701, %v1428, 0
      %v1451 = vsel %vm701, %v1436, 0
      %v1454 = vsel %vm718, %v1372, 0
      %1456 = vmatpush.msra.mxu0 0.0
      %1457 = vmatpush.msra.mxu0 0.0
      %1458 = vmatpush.msra.mxu0 0.0
      %1459 = vmatpush.msra.mxu0 0.0
      %1460 = vmatpush.msra.mxu0 0.0
      %1461 = vmatpush.msra.mxu0 0.0
      %1462 = vmatpush.msra.mxu0 0.0
      %1463 = vmatpush.msra.mxu0 0.0
      %1464 = vmatpush.msra.mxu0 0.0
      %1465 = vmatpush.msra.mxu0 0.0
      %1466 = vmatpush.msra.mxu0 0.0
      %1467 = vmatpush.msra.mxu0 0.0
      %1468 = vmatpush.msra.mxu0 0.0
      %1469 = vmatpush.msra.mxu0 0.0
      %1470 = vmatpush.msra.mxu0 0.0
      %1471 = vmatpush.msra.mxu0 %v1454
      %1472 = vmatmul.f32.gmra.mxu0 %v1437
      %v1473 = vpop.f32.mrf.mxu0
      %v1474 = vadd.f32 0.0, %v1473
      %1475 = vmatmul.f32.gmra.mxu0 %v1439
      %v1476 = vpop.f32.mrf.mxu0
      %v1477 = vadd.f32 0.0, %v1476
      %1478 = vmatmul.f32.gmra.mxu0 %v1441
      %v1479 = vpop.f32.mrf.mxu0
      %v1480 = vadd.f32 0.0, %v1479
      %1481 = vmatmul.f32.gmra.mxu0 %v1443
      %v1482 = vpop.f32.mrf.mxu0
      %v1483 = vadd.f32 0.0, %v1482
      %1484 = vmatmul.f32.gmra.mxu0 %v1445
      %v1485 = vpop.f32.mrf.mxu0
      %v1486 = vadd.f32 0.0, %v1485
      %1487 = vmatmul.f32.gmra.mxu0 %v1447
      %v1488 = vpop.f32.mrf.mxu0
      %v1489 = vadd.f32 0.0, %v1488
      %1490 = vmatmul.f32.gmra.mxu0 %v1449
      %v1491 = vpop.f32.mrf.mxu0
      %v1492 = vadd.f32 0.0, %v1491
      %1493 = vmatmul.f32.gmra.mxu0 %v1451
      %v1494 = vpop.f32.mrf.mxu0
      %v1495 = vadd.f32 0.0, %v1494
      %1496 = vdwg.mxu0
      %v1497 = vadd.f32 %v1363, %v1474
      %v1498 = vadd.f32 %v1364, %v1477
      %v1499 = vadd.f32 %v1365, %v1480
      %v1500 = vadd.f32 %v1366, %v1483
      %v1501 = vadd.f32 %v1367, %v1486
      %v1502 = vadd.f32 %v1368, %v1489
      %v1503 = vadd.f32 %v1369, %v1492
      %v1504 = vadd.f32 %v1370, %v1495
      %s1505 = scalar_lea.vmem %s2, 20
      %v1506 = vld [vmem:[%s1505] sm:$0xf]
      %v1508 = vsel %vm701, %v1173, 0
      %v1511 = vsel %vm701, %v1174, 0
      %v1514 = vsel %vm701, %v1175, 0
      %v1517 = vsel %vm701, %v1176, 0
      %v1520 = vsel %vm701, %v1177, 0
      %v1523 = vsel %vm701, %v1178, 0
      %v1526 = vsel %vm701, %v1179, 0
      %v1529 = vsel %vm701, %v1180, 0
      %v1532 = vsel %vm718, %v1506, 0
      %1534 = vmatpush.msra.mxu0 0.0
      %1535 = vmatpush.msra.mxu0 0.0
      %1536 = vmatpush.msra.mxu0 0.0
      %1537 = vmatpush.msra.mxu0 0.0
      %1538 = vmatpush.msra.mxu0 0.0
      %1539 = vmatpush.msra.mxu0 0.0
      %1540 = vmatpush.msra.mxu0 0.0
      %1541 = vmatpush.msra.mxu0 0.0
      %1542 = vmatpush.msra.mxu0 0.0
      %1543 = vmatpush.msra.mxu0 0.0
      %1544 = vmatpush.msra.mxu0 0.0
      %1545 = vmatpush.msra.mxu0 0.0
      %1546 = vmatpush.msra.mxu0 0.0
      %1547 = vmatpush.msra.mxu0 0.0
      %1548 = vmatpush.msra.mxu0 0.0
      %1549 = vmatpush.msra.mxu0 %v1532
      %1550 = vmatmul.f32.gmra.mxu0 %v1508
      %v1551 = vpop.f32.mrf.mxu0
      %v1552 = vadd.f32 0.0, %v1551
      %1553 = vmatmul.f32.gmra.mxu0 %v1511
      %v1554 = vpop.f32.mrf.mxu0
      %v1555 = vadd.f32 0.0, %v1554
      %1556 = vmatmul.f32.gmra.mxu0 %v1514
      %v1557 = vpop.f32.mrf.mxu0
      %v1558 = vadd.f32 0.0, %v1557
      %1559 = vmatmul.f32.gmra.mxu0 %v1517
      %v1560 = vpop.f32.mrf.mxu0
      %v1561 = vadd.f32 0.0, %v1560
      %1562 = vmatmul.f32.gmra.mxu0 %v1520
      %v1563 = vpop.f32.mrf.mxu0
      %v1564 = vadd.f32 0.0, %v1563
      %1565 = vmatmul.f32.gmra.mxu0 %v1523
      %v1566 = vpop.f32.mrf.mxu0
      %v1567 = vadd.f32 0.0, %v1566
      %1568 = vmatmul.f32.gmra.mxu0 %v1526
      %v1569 = vpop.f32.mrf.mxu0
      %v1570 = vadd.f32 0.0, %v1569
      %1571 = vmatmul.f32.gmra.mxu0 %v1529
      %v1572 = vpop.f32.mrf.mxu0
      %v1573 = vadd.f32 0.0, %v1572
      %1574 = vdwg.mxu0
      %v1575 = vadd.f32 %v1497, %v1552
      %v1576 = vadd.f32 %v1498, %v1555
      %v1577 = vadd.f32 %v1499, %v1558
      %v1578 = vadd.f32 %v1500, %v1561
      %v1579 = vadd.f32 %v1501, %v1564
      %v1580 = vadd.f32 %v1502, %v1567
      %v1581 = vadd.f32 %v1503, %v1570
      %v1582 = vadd.f32 %v1504, %v1573
      %v1590 = vrot.slane %v444, 7
      %v1591 = vsel %vm507, %v1590, %v443
      %v1592 = vrot.slane %v445, 6
      %v1593 = vsel %vm510, %v1592, %v1591
      %v1594 = vrot.slane %v446, 5
      %v1595 = vsel %vm513, %v1594, %v1593
      %v1596 = vrot.slane %v447, 4
      %v1597 = vsel %vm516, %v1596, %v1595
      %v1598 = vrot.slane %v448, 3
      %v1599 = vsel %vm519, %v1598, %v1597
      %v1600 = vrot.slane %v449, 2
      %v1601 = vsel %vm522, %v1600, %v1599
      %v1603 = vsel %vm616, %v1601, 0.0
      %s1604 = scalar_lea.vmem %s2, 24
      %v1605 = vld [vmem:[%s1604] sm:$0xf]
      %v1607 = vrot.slane %v443, 7
      %v1608 = vsel %vm507, %v1607, %v442
      %v1609 = vrot.slane %v444, 6
      %v1610 = vsel %vm510, %v1609, %v1608
      %v1611 = vrot.slane %v445, 5
      %v1612 = vsel %vm513, %v1611, %v1610
      %v1613 = vrot.slane %v446, 4
      %v1614 = vsel %vm516, %v1613, %v1612
      %v1615 = vrot.slane %v447, 3
      %v1616 = vsel %vm519, %v1615, %v1614
      %v1617 = vrot.slane %v448, 2
      %v1618 = vsel %vm522, %v1617, %v1616
      %v1619 = vrot.slane %v449, 1
      %v1620 = vsel %vm643, %v1619, %v1618
      %v1621 = vsel %vm701, %v1620, 0
      %v1624 = vsel %vm718, %v1605, 0
      %1626 = vmatpush.msra.mxu0 0.0
      %1627 = vmatpush.msra.mxu0 0.0
      %1628 = vmatpush.msra.mxu0 0.0
      %1629 = vmatpush.msra.mxu0 0.0
      %1630 = vmatpush.msra.mxu0 0.0
      %1631 = vmatpush.msra.mxu0 0.0
      %1632 = vmatpush.msra.mxu0 0.0
      %1633 = vmatpush.msra.mxu0 0.0
      %1634 = vmatpush.msra.mxu0 0.0
      %1635 = vmatpush.msra.mxu0 0.0
      %1636 = vmatpush.msra.mxu0 0.0
      %1637 = vmatpush.msra.mxu0 0.0
      %1638 = vmatpush.msra.mxu0 0.0
      %1639 = vmatpush.msra.mxu0 0.0
      %1640 = vmatpush.msra.mxu0 0.0
      %1641 = vmatpush.msra.mxu0 %v1624
      %1642 = vmatmul.f32.gmra.mxu0 %v877
      %v1643 = vpop.f32.mrf.mxu0
      %v1644 = vadd.f32 0.0, %v1643
      %1645 = vmatmul.f32.gmra.mxu0 %v879
      %v1646 = vpop.f32.mrf.mxu0
      %v1647 = vadd.f32 0.0, %v1646
      %1648 = vmatmul.f32.gmra.mxu0 %v881
      %v1649 = vpop.f32.mrf.mxu0
      %v1650 = vadd.f32 0.0, %v1649
      %1651 = vmatmul.f32.gmra.mxu0 %v883
      %v1652 = vpop.f32.mrf.mxu0
      %v1653 = vadd.f32 0.0, %v1652
      %1654 = vmatmul.f32.gmra.mxu0 %v885
      %v1655 = vpop.f32.mrf.mxu0
      %v1656 = vadd.f32 0.0, %v1655
      %1657 = vmatmul.f32.gmra.mxu0 %v887
      %v1658 = vpop.f32.mrf.mxu0
      %v1659 = vadd.f32 0.0, %v1658
      %1660 = vmatmul.f32.gmra.mxu0 %v889
      %v1661 = vpop.f32.mrf.mxu0
      %v1662 = vadd.f32 0.0, %v1661
      %1663 = vmatmul.f32.gmra.mxu0 %v1621
      %v1664 = vpop.f32.mrf.mxu0
      %v1665 = vadd.f32 0.0, %v1664
      %1666 = vdwg.mxu0
      %v1667 = vadd.f32 %v1575, %v1644
      %v1668 = vadd.f32 %v1576, %v1647
      %v1669 = vadd.f32 %v1577, %v1650
      %v1670 = vadd.f32 %v1578, %v1653
      %v1671 = vadd.f32 %v1579, %v1656
      %v1672 = vadd.f32 %v1580, %v1659
      %v1673 = vadd.f32 %v1581, %v1662
      %v1674 = vadd.f32 %v1582, %v1665
      %s1675 = scalar_lea.vmem %s2, 28
      %v1676 = vld [vmem:[%s1675] sm:$0xf]
      %v1677 = vrot.slane %v442, 1
      %v1678 = vsel %vm507, %v443, %v1677
      %v1679 = vsel %vm510, %v1590, %v1678
      %v1680 = vsel %vm513, %v1592, %v1679
      %v1681 = vsel %vm516, %v1594, %v1680
      %v1682 = vsel %vm519, %v1596, %v1681
      %v1683 = vsel %vm522, %v1598, %v1682
      %v1684 = vsel %vm643, %v1600, %v1683
      %v1685 = vsel %vm701, %v1684, 0
      %v1688 = vsel %vm718, %v1676, 0
      %1690 = vmatpush.msra.mxu0 0.0
      %1691 = vmatpush.msra.mxu0 0.0
      %1692 = vmatpush.msra.mxu0 0.0
      %1693 = vmatpush.msra.mxu0 0.0
      %1694 = vmatpush.msra.mxu0 0.0
      %1695 = vmatpush.msra.mxu0 0.0
      %1696 = vmatpush.msra.mxu0 0.0
      %1697 = vmatpush.msra.mxu0 0.0
      %1698 = vmatpush.msra.mxu0 0.0
      %1699 = vmatpush.msra.mxu0 0.0
      %1700 = vmatpush.msra.mxu0 0.0
      %1701 = vmatpush.msra.mxu0 0.0
      %1702 = vmatpush.msra.mxu0 0.0
      %1703 = vmatpush.msra.mxu0 0.0
      %1704 = vmatpush.msra.mxu0 0.0
      %1705 = vmatpush.msra.mxu0 %v1688
      %1706 = vmatmul.f32.gmra.mxu0 %v704
      %v1707 = vpop.f32.mrf.mxu0
      %v1708 = vadd.f32 0.0, %v1707
      %1709 = vmatmul.f32.gmra.mxu0 %v706
      %v1710 = vpop.f32.mrf.mxu0
      %v1711 = vadd.f32 0.0, %v1710
      %1712 = vmatmul.f32.gmra.mxu0 %v708
      %v1713 = vpop.f32.mrf.mxu0
      %v1714 = vadd.f32 0.0, %v1713
      %1715 = vmatmul.f32.gmra.mxu0 %v710
      %v1716 = vpop.f32.mrf.mxu0
      %v1717 = vadd.f32 0.0, %v1716
      %1718 = vmatmul.f32.gmra.mxu0 %v712
      %v1719 = vpop.f32.mrf.mxu0
      %v1720 = vadd.f32 0.0, %v1719
      %1721 = vmatmul.f32.gmra.mxu0 %v714
      %v1722 = vpop.f32.mrf.mxu0
      %v1723 = vadd.f32 0.0, %v1722
      %1724 = vmatmul.f32.gmra.mxu0 %v716
      %v1725 = vpop.f32.mrf.mxu0
      %v1726 = vadd.f32 0.0, %v1725
      %1727 = vmatmul.f32.gmra.mxu0 %v1685
      %v1728 = vpop.f32.mrf.mxu0
      %v1729 = vadd.f32 0.0, %v1728
      %1730 = vdwg.mxu0
      %v1731 = vadd.f32 %v1667, %v1708
      %v1732 = vadd.f32 %v1668, %v1711
      %v1733 = vadd.f32 %v1669, %v1714
      %v1734 = vadd.f32 %v1670, %v1717
      %v1735 = vadd.f32 %v1671, %v1720
      %v1736 = vadd.f32 %v1672, %v1723
      %v1737 = vadd.f32 %v1673, %v1726
      %v1738 = vadd.f32 %v1674, %v1729
      %s1739 = scalar_lea.vmem %s2, 32
      %v1740 = vld [vmem:[%s1739] sm:$0xf]
      %v1742 = vsel %vm701, %v1603, 0
      %v1745 = vsel %vm718, %v1740, 0
      %1747 = vmatpush.msra.mxu0 0.0
      %1748 = vmatpush.msra.mxu0 0.0
      %1749 = vmatpush.msra.mxu0 0.0
      %1750 = vmatpush.msra.mxu0 0.0
      %1751 = vmatpush.msra.mxu0 0.0
      %1752 = vmatpush.msra.mxu0 0.0
      %1753 = vmatpush.msra.mxu0 0.0
      %1754 = vmatpush.msra.mxu0 0.0
      %1755 = vmatpush.msra.mxu0 0.0
      %1756 = vmatpush.msra.mxu0 0.0
      %1757 = vmatpush.msra.mxu0 0.0
      %1758 = vmatpush.msra.mxu0 0.0
      %1759 = vmatpush.msra.mxu0 0.0
      %1760 = vmatpush.msra.mxu0 0.0
      %1761 = vmatpush.msra.mxu0 0.0
      %1762 = vmatpush.msra.mxu0 %v1745
      %1763 = vmatmul.f32.gmra.mxu0 %v941
      %v1764 = vpop.f32.mrf.mxu0
      %v1765 = vadd.f32 0.0, %v1764
      %1766 = vmatmul.f32.gmra.mxu0 %v944
      %v1767 = vpop.f32.mrf.mxu0
      %v1768 = vadd.f32 0.0, %v1767
      %1769 = vmatmul.f32.gmra.mxu0 %v947
      %v1770 = vpop.f32.mrf.mxu0
      %v1771 = vadd.f32 0.0, %v1770
      %1772 = vmatmul.f32.gmra.mxu0 %v950
      %v1773 = vpop.f32.mrf.mxu0
      %v1774 = vadd.f32 0.0, %v1773
      %1775 = vmatmul.f32.gmra.mxu0 %v953
      %v1776 = vpop.f32.mrf.mxu0
      %v1777 = vadd.f32 0.0, %v1776
      %1778 = vmatmul.f32.gmra.mxu0 %v956
      %v1779 = vpop.f32.mrf.mxu0
      %v1780 = vadd.f32 0.0, %v1779
      %1781 = vmatmul.f32.gmra.mxu0 %v959
      %v1782 = vpop.f32.mrf.mxu0
      %v1783 = vadd.f32 0.0, %v1782
      %1784 = vmatmul.f32.gmra.mxu0 %v1742
      %v1785 = vpop.f32.mrf.mxu0
      %v1786 = vadd.f32 0.0, %v1785
      %1787 = vdwg.mxu0
      %v1788 = vadd.f32 %v1731, %v1765
      %v1789 = vadd.f32 %v1732, %v1768
      %v1790 = vadd.f32 %v1733, %v1771
      %v1791 = vadd.f32 %v1734, %v1774
      %v1792 = vadd.f32 %v1735, %v1777
      %v1793 = vadd.f32 %v1736, %v1780
      %v1794 = vadd.f32 %v1737, %v1783
      %v1795 = vadd.f32 %v1738, %v1786
      %v1796 = vld [vmem:[%s3] sm:$0x1]
      %v1798 = vperm.slane %v1796, 0
      %v1800 = vadd.f32 %v1788, %v1798
      %v1801 = vadd.f32 %v1789, %v1798
      %v1802 = vadd.f32 %v1790, %v1798
      %v1803 = vadd.f32 %v1791, %v1798
      %v1804 = vadd.f32 %v1792, %v1798
      %v1805 = vadd.f32 %v1793, %v1798
      %v1806 = vadd.f32 %v1794, %v1798
      %v1807 = vadd.f32 %v1795, %v1798
      %1808 = vst.msk [vmem:[%s300] sm:$0xff] %vm701, %v1800
      %1809 = vst.msk [vmem:[%s300 + $0x8] sm:$0xff] %vm701, %v1801
      %1810 = vst.msk [vmem:[%s300 + $0x10] sm:$0xff] %vm701, %v1802
      %1811 = vst.msk [vmem:[%s300 + $0x18] sm:$0xff] %vm701, %v1803
      %1812 = vst.msk [vmem:[%s300 + $0x20] sm:$0xff] %vm701, %v1804
      %1813 = vst.msk [vmem:[%s300 + $0x28] sm:$0xff] %vm701, %v1805
      %1814 = vst.msk [vmem:[%s300 + $0x30] sm:$0xff] %vm701, %v1806
      %1815 = vst.msk [vmem:[%s300 + $0x38] sm:$0xff] %vm701, %v1807
      %s1816 = smul.u32 8, %s20
      %p1817 = scmp.lt.s32.totalorder %s19, 1
      %s1818 = scalar_select %p1817, %s19, 1
      %p1819 = scmp.lt.s32.totalorder %s1816, 7
      %s1820 = scalar_select %p1819, %s1816, 7
      %s1821 = smul.addr %s1818, 8
      %s1822 = sadd.s32 %s1820, %s1821
      %s1823 = smul.addr %s1822, 8
      %s1824 = scalar_lea.vmem %s4, %s1823
      // Predicated region
      $region37: #{tpu_custom_call.1} parent=35 // pred_check
        %p1825 = pneg %p153
      $region38: #{tpu_custom_call.1} parent=35 // pred_check_branch
        %1827 = sbr.rel (%p1825) target = $region40
      $region39: #{tpu_custom_call.1} parent=35 // pred_region
        %s1828 = smul.u32 8, %s20
      $region40: #{tpu_custom_call.1} parent=35 // pred_fallthru
        _
    $region36: #{tpu_custom_call.1} parent=5 // pred_fallthru
      _
    %p1829 = scmp.le.s32.totalorder 2, %s10
    // Predicated region
    $region41: #{tpu_custom_call.1} parent=5 // pred_check
      %p1830 = pneg %p1829
    $region42: #{tpu_custom_call.1} parent=5 // pred_check_branch
      %1832 = sbr.rel (%p1830) target = $region44
    $region43: #{tpu_custom_call.1} parent=5 // pred_region
      %s1833 = ssub.s32 %s10, 2
      // Predicated region
      $region45: #{tpu_custom_call.1} parent=43 // pred_check
        %p1834 = pneg %p159
      $region46: #{tpu_custom_call.1} parent=43 // pred_check_branch
        %1836 = sbr.rel (%p1834) target = $region48
      $region47: #{tpu_custom_call.1} parent=43 // pred_region
        %s1837 = smul.u32 8, %s22
        %p1838 = scmp.lt.s32.totalorder %s21, 1
        %s1839 = scalar_select %p1838, %s21, 1
        %p1840 = scmp.lt.s32.totalorder %s1837, 7
        %s1841 = scalar_select %p1840, %s1837, 7
        %s1842 = smul.addr %s1839, 8
        %s1843 = sadd.s32 %s1841, %s1842
        %s1844 = smul.addr %s1843, 8
        %s1845 = scalar_lea.vmem %s4, %s1844
      $region48: #{tpu_custom_call.1} parent=43 // pred_fallthru
        _
    $region44: #{tpu_custom_call.1} parent=5 // pred_fallthru
      _
  $region6: #{tpu_custom_call.1} parent=0 // loop_footer
    %s14 = sadd.s32 1, %s10
  $region7: #{tpu_custom_call.1} parent=0 // loop_footer_branch
    %9 = sbr.rel target = $region3
  $region8: #{tpu_custom_call.1} parent=0 // loop_exit
    _

</llo_original>
